<compile_context>
chip_gen: v6e
topology: v6e:2x2x1
jax: 0.10.0
libtpu: 0.0.40
codegen_flags: <defaults>
</compile_context>

<pallas_src>
import jax
import jax.numpy as jnp
from jax.experimental import pallas as pl
from jax.experimental.pallas import tpu as pltpu

# ---- small synthetic BERT config (consistent with the module's forward) ----
B, S, H = 2, 8, 32          # batch, seq, hidden
NUM_HEADS = 2
HEAD_DIM = H // NUM_HEADS
INTERMEDIATE = 64
NUM_LAYERS = 2
VOCAB = 128
LN_EPS = 1e-12

# packed parameter slabs
VEC_ROWS, VEC_LANES = 8, 128            # per-layer bias/LN slab = one (8,128) f32 tile
W_ROWS = max(H, INTERMEDIATE)           # 64
W_COLS = 512                            # 128-lane-aligned columns: wqkv | wo | w1 | w2
COL_QKV, COL_WO, COL_W1, COL_W2 = 0, 128, 256, 384


# --------------------------------------------------------------------------
# in-kernel helpers
# --------------------------------------------------------------------------
def _layernorm(x, gamma, beta):
    mu = jnp.mean(x, axis=-1, keepdims=True)
    var = jnp.mean(jnp.square(x - mu), axis=-1, keepdims=True)
    inv = jax.lax.rsqrt(var + LN_EPS)
    return (x - mu) * inv * gamma + beta


# --------------------------------------------------------------------------
# Pallas kernel: full BERT encoder stack + masked mean pooling for ONE batch
# element (grid axis = batch, "parallel" for v7x megacore).
#
#   h_ref    : [S, H]            f32   embeddings (post embedding-LN), this batch elem
#   mrow_ref : [1, S]            f32   attention mask, row layout (key axis = lanes)
#   mcol_ref : [S, 1]            f32   attention mask, column layout (for pooling)
#   w_ref    : [L, 64, 512]      bf16  packed matmul weights (wqkv|wo|w1|w2)
#   vec_ref  : [L, 8, 128]       f32   packed biases / LN params
#   out_ref  : [1, H]            f32   masked-mean pooled output row
# --------------------------------------------------------------------------
def bert_fused_kernel(h_ref, mrow_ref, mcol_ref, w_ref, vec_ref, out_ref):
    f32 = jnp.float32
    bf16 = jnp.bfloat16

    h = h_ref[...]                                   # [S, H] f32
    mrow = mrow_ref[...]                             # [1, S] f32
    mcol = mcol_ref[...]                             # [S, 1] f32

    # additive attention bias over keys (broadcasts across query rows; hoisted)
    neg = (1.0 - mrow) * (-1e9)                      # [1, S]
    scale = 1.0 / (HEAD_DIM ** 0.5)

    qk_dims = (((1,), (1,)), ((), ()))               # q @ k^T without explicit transpose

    for layer in range(NUM_LAYERS):                  # static unroll; weights VMEM-resident
        wl = w_ref[layer]                            # [64, 512] bf16
        wqkv = wl[0:H, COL_QKV:COL_QKV + 3 * H]      # [H, 3H]
        wo = wl[0:H, COL_WO:COL_WO + H]              # [H, H]
        w1 = wl[0:H, COL_W1:COL_W1 + INTERMEDIATE]   # [H, I]
        w2 = wl[0:INTERMEDIATE, COL_W2:COL_W2 + H]   # [I, H]

        vecs = vec_ref[layer]                        # [8, 128] f32 packed slab
        bqkv = vecs[0:1, :3 * H]                     # [1, 3H]
        bo = vecs[1:2, :H]
        ln1g = vecs[2:3, :H]
        ln1b = vecs[3:4, :H]
        b1 = vecs[4:5, :INTERMEDIATE]
        b2 = vecs[5:6, :H]
        ln2g = vecs[6:7, :H]
        ln2b = vecs[7:8, :H]

        # fused QKV projection: one [S, H] x [H, 3H] MXU push (bf16 in, f32 acc)
        qkv = jnp.dot(h.astype(bf16), wqkv,
                      preferred_element_type=f32) + bqkv           # [S, 3H]

        # attention; head concat is folded into the Wo projection via MXU accumulate
        attn = None
        for hh in range(NUM_HEADS):
            lo = hh * HEAD_DIM
            q_h = qkv[:, lo:lo + HEAD_DIM].astype(bf16)            # [S, hd]
            k_h = qkv[:, H + lo:H + lo + HEAD_DIM].astype(bf16)
            v_h = qkv[:, 2 * H + lo:2 * H + lo + HEAD_DIM].astype(bf16)

            sc = jax.lax.dot_general(q_h, k_h, qk_dims,
                                     preferred_element_type=f32) * scale + neg  # [S,S]
            m = jnp.max(sc, axis=-1, keepdims=True)
            p = jnp.exp(sc - m)
            den = jnp.sum(p, axis=-1, keepdims=True)
            p = p * pl.reciprocal(den, approx=True)                # EUP, hot path only
            ch = jnp.dot(p.astype(bf16), v_h,
                         preferred_element_type=f32)               # [S, hd]
            contrib = jnp.dot(ch.astype(bf16), wo[lo:lo + HEAD_DIM, :],
                              preferred_element_type=f32)          # [S, H]
            attn = contrib if attn is None else attn + contrib
        attn = attn + bo

        h1 = _layernorm(h + attn, ln1g, ln1b)

        ff = jnp.dot(h1.astype(bf16), w1,
                     preferred_element_type=f32) + b1              # [S, I]
        ff = jax.nn.gelu(ff, approximate=True)
        ff = jnp.dot(ff.astype(bf16), w2,
                     preferred_element_type=f32) + b2              # [S, H]
        h = _layernorm(h1 + ff, ln2g, ln2b)

    # masked mean pooling epilogue (the explicit part of Custom_Bert.forward).
    # Exact division: the denominator is an integer token count (per review).
    num = jnp.sum(h * mcol, axis=0, keepdims=True)                 # [1, H]
    den = jnp.maximum(jnp.sum(mcol, axis=0, keepdims=True), 1.0)   # [1, 1] (NaN guard)
    out_ref[...] = num / den


def bert_fused(h0, mask_row, mask_col, wslab, vecs):
    out = pl.pallas_call(
        bert_fused_kernel,
        out_shape=jax.ShapeDtypeStruct((B, 1, H), jnp.float32),
        grid=(B,),
        in_specs=[
            pl.BlockSpec((None, S, H), lambda b: (b, 0, 0)),            # h0
            pl.BlockSpec((None, 1, S), lambda b: (b, 0, 0)),            # mask row
            pl.BlockSpec((None, S, 1), lambda b: (b, 0, 0)),            # mask col
            pl.BlockSpec((NUM_LAYERS, W_ROWS, W_COLS), lambda b: (0, 0, 0)),
            pl.BlockSpec((NUM_LAYERS, VEC_ROWS, VEC_LANES), lambda b: (0, 0, 0)),
        ],
        out_specs=pl.BlockSpec((None, 1, H), lambda b: (b, 0, 0)),
        compiler_params=pltpu.CompilerParams(
            dimension_semantics=("parallel",)),                          # v7x megacore
    )(h0, mask_row, mask_col, wslab, vecs)
    return out.reshape(B, H)


# --------------------------------------------------------------------------
# deterministic parameter init (synthetic checkpoint) + packing for the kernel
# --------------------------------------------------------------------------
def init_params(key):
    def nrm(k, shape, std=0.02):
        return (std * jax.random.normal(k, shape)).astype(jnp.float32)

    keys = iter(jax.random.split(key, 3 + NUM_LAYERS * 16))
    params = {
        "word_emb": nrm(next(keys), (VOCAB, H)),
        "pos_emb": nrm(next(keys), (S, H)),
        "type_emb": nrm(next(keys), (1, H)),
        "emb_ln_g": jnp.ones((1, H), jnp.float32),
        "emb_ln_b": jnp.zeros((1, H), jnp.float32),
        "layers": [],
    }
    for _ in range(NUM_LAYERS):
        wq = nrm(next(keys), (H, H)); bq = nrm(next(keys), (1, H))
        wk = nrm(next(keys), (H, H)); bk = nrm(next(keys), (1, H))
        wv = nrm(next(keys), (H, H)); bv = nrm(next(keys), (1, H))
        wo = nrm(next(keys), (H, H)); bo = nrm(next(keys), (1, H))
        g1 = 1.0 + nrm(next(keys), (1, H)); be1 = nrm(next(keys), (1, H))
        w1 = nrm(next(keys), (H, INTERMEDIATE)); bi1 = nrm(next(keys), (1, INTERMEDIATE))
        w2 = nrm(next(keys), (INTERMEDIATE, H)); bi2 = nrm(next(keys), (1, H))
        g2 = 1.0 + nrm(next(keys), (1, H)); be2 = nrm(next(keys), (1, H))
        params["layers"].append((wq, bq, wk, bk, wv, bv, wo, bo,
                                 g1, be1, w1, bi1, w2, bi2, g2, be2))
    return params


def pack_params(params):
    """Fuse QKV, pack all matmul weights into one 128-lane-aligned bf16 slab per
    layer and all bias/LN vectors into one (8,128) f32 slab per layer."""
    def pad_row(v):
        return jnp.pad(v, ((0, 0), (0, VEC_LANES - v.shape[1])))

    wslab_l, vec_l = [], []
    for (wq, bq, wk, bk, wv, bv, wo, bo,
         g1, be1, w1, bi1, w2, bi2, g2, be2) in params["layers"]:
        slab = jnp.zeros((W_ROWS, W_COLS), jnp.float32)
        wqkv = jnp.concatenate([wq, wk, wv], axis=1)              # [H, 3H]
        slab = slab.at[0:H, COL_QKV:COL_QKV + 3 * H].set(wqkv)
        slab = slab.at[0:H, COL_WO:COL_WO + H].set(wo)
        slab = slab.at[0:H, COL_W1:COL_W1 + INTERMEDIATE].set(w1)
        slab = slab.at[0:INTERMEDIATE, COL_W2:COL_W2 + H].set(w2)
        wslab_l.append(slab)

        bqkv = jnp.concatenate([bq, bk, bv], axis=1)              # [1, 3H]
        rows = [pad_row(bqkv), pad_row(bo), pad_row(g1), pad_row(be1),
                pad_row(bi1), pad_row(bi2), pad_row(g2), pad_row(be2)]
        vec_l.append(jnp.concatenate(rows, axis=0))               # [8, 128]
    return (jnp.stack(wslab_l).astype(jnp.bfloat16),              # [L, 64, 512] bf16
            jnp.stack(vec_l).astype(jnp.float32))                 # [L, 8, 128]  f32


# --------------------------------------------------------------------------
# full forward: embeddings (glue: gather + LN) -> single fused Pallas kernel
# --------------------------------------------------------------------------
def custom_bert_forward(input_ids, attention_mask, params, packed):
    # TODO(synk): original module loads a pretrained HF checkpoint; weights are synthetic,
    # and the embedding gather + embedding LayerNorm stay in plain JAX glue (could be
    # folded into the kernel via scalar-prefetched input_ids at real sizes).
    wslab, vecs = packed
    mask_f = attention_mask.astype(jnp.float32)                   # [B, S]
    e = (params["word_emb"][input_ids]
         + params["pos_emb"][None, :, :]
         + params["type_emb"][0][None, None, :])
    mu = e.mean(-1, keepdims=True)
    var = ((e - mu) ** 2).mean(-1, keepdims=True)
    h0 = ((e - mu) * jax.lax.rsqrt(var + LN_EPS)
          * params["emb_ln_g"] + params["emb_ln_b"]).astype(jnp.float32)   # [B, S, H]
    mask_row = mask_f.reshape(B, 1, S)
    mask_col = mask_f.reshape(B, S, 1)
    return bert_fused(h0, mask_row, mask_col, wslab, vecs)        # Pallas (fused)


# --------------------------------------------------------------------------
# pure-JAX reference (same math, f32 weights) for a correctness sanity check
# --------------------------------------------------------------------------
def reference_forward(input_ids, attention_mask, params):
    mask_f = attention_mask.astype(jnp.float32)
    e = (params["word_emb"][input_ids]
         + params["pos_emb"][None, :, :]
         + params["type_emb"][0][None, None, :])
    mu = e.mean(-1, keepdims=True)
    var = ((e - mu) ** 2).mean(-1, keepdims=True)
    h = (e - mu) * jax.lax.rsqrt(var + LN_EPS) * params["emb_ln_g"] + params["emb_ln_b"]
    bias = ((1.0 - mask_f) * -1e9)[:, None, :]

    def ln(x, g, b):
        m = x.mean(-1, keepdims=True)
        v = ((x - m) ** 2).mean(-1, keepdims=True)
        return (x - m) * jax.lax.rsqrt(v + LN_EPS) * g + b

    for (wq, bq, wk, bk, wv, bv, wo, bo,
         g1, be1, w1, bi1, w2, bi2, g2, be2) in params["layers"]:
        q = h @ wq + bq; k = h @ wk + bk; v = h @ wv + bv
        ctxs = []
        for hh in range(NUM_HEADS):
            sl = slice(hh * HEAD_DIM, (hh + 1) * HEAD_DIM)
            sc = jnp.einsum('bqd,bkd->bqk', q[:, :, sl], k[:, :, sl]) / (HEAD_DIM ** 0.5) + bias
            p = jax.nn.softmax(sc, axis=-1)
            ctxs.append(jnp.einsum('bqk,bkd->bqd', p, v[:, :, sl]))
        attn = jnp.concatenate(ctxs, -1) @ wo + bo
        h1 = ln(h + attn, g1, be1)
        ff = jax.nn.gelu(h1 @ w1 + bi1, approximate=True) @ w2 + bi2
        h = ln(h1 + ff, g2, be2)

    m3 = mask_f[:, :, None]
    return jnp.sum(h * m3, axis=1) / jnp.sum(m3, axis=1)


if __name__ == "__main__":
    key = jax.random.PRNGKey(0)
    k_param, k_ids = jax.random.split(key)
    params = init_params(k_param)
    packed = pack_params(params)

    input_ids = jax.random.randint(k_ids, (B, S), 0, VOCAB, dtype=jnp.int32)
    lengths = jnp.array([S, 5], dtype=jnp.int32)
    attention_mask = (jnp.arange(S)[None, :] < lengths[:, None]).astype(jnp.int32)

    out = custom_bert_forward(input_ids, attention_mask, params, packed)
    out = jax.block_until_ready(out)
    assert out.shape == (B, H) and out.dtype == jnp.float32

    ref = reference_forward(input_ids, attention_mask, params)
    # tolerance accounts for bf16 MXU operands (f32 accumulation) vs the f32 reference
    assert jnp.allclose(out, ref, rtol=2e-2, atol=2e-2), "mismatch vs JAX reference"

    print("KERNEL_OK")
</pallas_src>

<mosaic_0001>
module attributes {stable_mosaic.version = 11 : i64} {
  func.func @bert_fused_kernel(%arg0: i32, %arg1: memref<1x8x32xf32, #tpu.memory_space<vmem>>, %arg2: memref<1x1x8xf32, #tpu.memory_space<vmem>>, %arg3: memref<1x8x1xf32, #tpu.memory_space<vmem>>, %arg4: memref<2x64x512xbf16, #tpu.memory_space<vmem>>, %arg5: memref<2x8x128xf32, #tpu.memory_space<vmem>>, %arg6: memref<1x1x32xf32, #tpu.memory_space<vmem>>) attributes {dimension_semantics = [#tpu.dimension_semantics<parallel>], iteration_bounds = array<i64: 2>, scalar_prefetch = 0 : i64, scratch_operands = 0 : i64, tpu.core_type = #tpu.core_type<tc>, window_params = [{transform_indices = @transform_0, window_bounds = array<i64: 1, 8, 32>}, {transform_indices = @transform_1, window_bounds = array<i64: 1, 1, 8>}, {transform_indices = @transform_2, window_bounds = array<i64: 1, 8, 1>}, {pipeline_mode = #tpu.pipeline_mode<synchronous>, transform_indices = @transform_3, window_bounds = array<i64: 2, 64, 512>}, {pipeline_mode = #tpu.pipeline_mode<synchronous>, transform_indices = @transform_4, window_bounds = array<i64: 2, 8, 128>}, {transform_indices = @transform_5, window_bounds = array<i64: 1, 1, 32>}]} {
    %c0 = arith.constant 0 : index
    %c0_0 = arith.constant 0 : index
    %c0_1 = arith.constant 0 : index
    %0 = vector.load %arg1[%c0, %c0_0, %c0_1] : memref<1x8x32xf32, #tpu.memory_space<vmem>>, vector<1x8x32xf32>
    %1 = vector.shape_cast %0 : vector<1x8x32xf32> to vector<8x32xf32>
    %c0_2 = arith.constant 0 : index
    %c0_3 = arith.constant 0 : index
    %c0_4 = arith.constant 0 : index
    %2 = vector.load %arg2[%c0_2, %c0_3, %c0_4] : memref<1x1x8xf32, #tpu.memory_space<vmem>>, vector<1x1x8xf32>
    %3 = vector.shape_cast %2 : vector<1x1x8xf32> to vector<1x8xf32>
    %c0_5 = arith.constant 0 : index
    %c0_6 = arith.constant 0 : index
    %c0_7 = arith.constant 0 : index
    %4 = vector.load %arg3[%c0_5, %c0_6, %c0_7] : memref<1x8x1xf32, #tpu.memory_space<vmem>>, vector<1x8x1xf32>
    %5 = vector.shape_cast %4 : vector<1x8x1xf32> to vector<8x1xf32>
    %cst = arith.constant 1.000000e+00 : f32
    %6 = vector.broadcast %cst : f32 to vector<1x8xf32>
    %7 = arith.subf %6, %3 : vector<1x8xf32>
    %cst_8 = arith.constant -1.000000e+09 : f32
    %8 = vector.broadcast %cst_8 : f32 to vector<1x8xf32>
    %9 = arith.mulf %7, %8 : vector<1x8xf32>
    %c0_9 = arith.constant 0 : index
    %c0_10 = arith.constant 0 : index
    %c0_11 = arith.constant 0 : index
    %10 = vector.load %arg4[%c0_9, %c0_10, %c0_11] : memref<2x64x512xbf16, #tpu.memory_space<vmem>>, vector<1x64x512xbf16>
    %11 = vector.shape_cast %10 : vector<1x64x512xbf16> to vector<64x512xbf16>
    %12 = vector.extract_strided_slice %11 {offsets = [0, 0], sizes = [32, 96], strides = [1, 1]} : vector<64x512xbf16> to vector<32x96xbf16>
    %13 = vector.extract_strided_slice %11 {offsets = [0, 128], sizes = [32, 32], strides = [1, 1]} : vector<64x512xbf16> to vector<32x32xbf16>
    %14 = vector.extract_strided_slice %11 {offsets = [0, 256], sizes = [32, 64], strides = [1, 1]} : vector<64x512xbf16> to vector<32x64xbf16>
    %15 = vector.extract_strided_slice %11 {offsets = [0, 384], sizes = [64, 32], strides = [1, 1]} : vector<64x512xbf16> to vector<64x32xbf16>
    %c0_12 = arith.constant 0 : index
    %c0_13 = arith.constant 0 : index
    %c0_14 = arith.constant 0 : index
    %16 = vector.load %arg5[%c0_12, %c0_13, %c0_14] : memref<2x8x128xf32, #tpu.memory_space<vmem>>, vector<1x8x128xf32>
    %17 = vector.shape_cast %16 : vector<1x8x128xf32> to vector<8x128xf32>
    %18 = vector.extract_strided_slice %17 {offsets = [0, 0], sizes = [1, 96], strides = [1, 1]} : vector<8x128xf32> to vector<1x96xf32>
    %19 = vector.extract_strided_slice %17 {offsets = [1, 0], sizes = [1, 32], strides = [1, 1]} : vector<8x128xf32> to vector<1x32xf32>
    %20 = vector.extract_strided_slice %17 {offsets = [2, 0], sizes = [1, 32], strides = [1, 1]} : vector<8x128xf32> to vector<1x32xf32>
    %21 = vector.extract_strided_slice %17 {offsets = [3, 0], sizes = [1, 32], strides = [1, 1]} : vector<8x128xf32> to vector<1x32xf32>
    %22 = vector.extract_strided_slice %17 {offsets = [4, 0], sizes = [1, 64], strides = [1, 1]} : vector<8x128xf32> to vector<1x64xf32>
    %23 = vector.extract_strided_slice %17 {offsets = [5, 0], sizes = [1, 32], strides = [1, 1]} : vector<8x128xf32> to vector<1x32xf32>
    %24 = vector.extract_strided_slice %17 {offsets = [6, 0], sizes = [1, 32], strides = [1, 1]} : vector<8x128xf32> to vector<1x32xf32>
    %25 = vector.extract_strided_slice %17 {offsets = [7, 0], sizes = [1, 32], strides = [1, 1]} : vector<8x128xf32> to vector<1x32xf32>
    %26 = arith.truncf %1 : vector<8x32xf32> to vector<8x32xbf16>
    %cst_15 = arith.constant dense<0.000000e+00> : vector<8x96xf32>
    %27 = tpu.matmul %26, %12, %cst_15 {dimension_numbers = #tpu.dot_dimension_numbers<[1], [0], [0], [1], [0, 0, 1, 1], [], []>} : vector<8x32xbf16>, vector<32x96xbf16>, vector<8x96xf32> -> vector<8x96xf32>
    %28 = vector.broadcast %18 : vector<1x96xf32> to vector<8x96xf32>
    %29 = arith.addf %27, %28 : vector<8x96xf32>
    %30 = vector.extract_strided_slice %29 {offsets = [0, 0], sizes = [8, 16], strides = [1, 1]} : vector<8x96xf32> to vector<8x16xf32>
    %31 = arith.truncf %30 : vector<8x16xf32> to vector<8x16xbf16>
    %32 = vector.extract_strided_slice %29 {offsets = [0, 32], sizes = [8, 16], strides = [1, 1]} : vector<8x96xf32> to vector<8x16xf32>
    %33 = arith.truncf %32 : vector<8x16xf32> to vector<8x16xbf16>
    %34 = vector.extract_strided_slice %29 {offsets = [0, 64], sizes = [8, 16], strides = [1, 1]} : vector<8x96xf32> to vector<8x16xf32>
    %35 = arith.truncf %34 : vector<8x16xf32> to vector<8x16xbf16>
    %cst_16 = arith.constant dense<0.000000e+00> : vector<8x8xf32>
    %36 = tpu.matmul %31, %33, %cst_16 {dimension_numbers = #tpu.dot_dimension_numbers<[1], [1], [0], [0], [0, 0, 1, 0], [], []>} : vector<8x16xbf16>, vector<8x16xbf16>, vector<8x8xf32> -> vector<8x8xf32>
    %cst_17 = arith.constant 2.500000e-01 : f32
    %37 = vector.broadcast %cst_17 : f32 to vector<8x8xf32>
    %38 = arith.mulf %36, %37 : vector<8x8xf32>
    %39 = vector.broadcast %9 : vector<1x8xf32> to vector<8x8xf32>
    %40 = arith.addf %38, %39 : vector<8x8xf32>
    %cst_18 = arith.constant dense<0xFF800000> : vector<8xf32>
    %41 = vector.multi_reduction <maximumf>, %40, %cst_18 [1] : vector<8x8xf32> to vector<8xf32>
    %42 = vector.shape_cast %41 : vector<8xf32> to vector<8x1xf32>
    %43 = vector.broadcast %42 : vector<8x1xf32> to vector<8x8xf32>
    %44 = arith.subf %40, %43 : vector<8x8xf32>
    %45 = math.exp %44 : vector<8x8xf32>
    %cst_19 = arith.constant dense<0.000000e+00> : vector<8xf32>
    %46 = vector.multi_reduction <add>, %45, %cst_19 [1] : vector<8x8xf32> to vector<8xf32>
    %47 = vector.shape_cast %46 : vector<8xf32> to vector<8x1xf32>
    %48 = tpu.reciprocal %47 {approx = true} : vector<8x1xf32> -> vector<8x1xf32>
    %49 = vector.broadcast %48 : vector<8x1xf32> to vector<8x8xf32>
    %50 = arith.mulf %45, %49 : vector<8x8xf32>
    %51 = arith.truncf %50 : vector<8x8xf32> to vector<8x8xbf16>
    %cst_20 = arith.constant dense<0.000000e+00> : vector<8x16xf32>
    %52 = tpu.matmul %51, %35, %cst_20 {dimension_numbers = #tpu.dot_dimension_numbers<[1], [0], [0], [1], [0, 0, 1, 1], [], []>} : vector<8x8xbf16>, vector<8x16xbf16>, vector<8x16xf32> -> vector<8x16xf32>
    %53 = arith.truncf %52 : vector<8x16xf32> to vector<8x16xbf16>
    %54 = vector.extract_strided_slice %13 {offsets = [0, 0], sizes = [16, 32], strides = [1, 1]} : vector<32x32xbf16> to vector<16x32xbf16>
    %cst_21 = arith.constant dense<0.000000e+00> : vector<8x32xf32>
    %55 = tpu.matmul %53, %54, %cst_21 {dimension_numbers = #tpu.dot_dimension_numbers<[1], [0], [0], [1], [0, 0, 1, 1], [], []>} : vector<8x16xbf16>, vector<16x32xbf16>, vector<8x32xf32> -> vector<8x32xf32>
    %56 = vector.extract_strided_slice %29 {offsets = [0, 16], sizes = [8, 16], strides = [1, 1]} : vector<8x96xf32> to vector<8x16xf32>
    %57 = arith.truncf %56 : vector<8x16xf32> to vector<8x16xbf16>
    %58 = vector.extract_strided_slice %29 {offsets = [0, 48], sizes = [8, 16], strides = [1, 1]} : vector<8x96xf32> to vector<8x16xf32>
    %59 = arith.truncf %58 : vector<8x16xf32> to vector<8x16xbf16>
    %60 = vector.extract_strided_slice %29 {offsets = [0, 80], sizes = [8, 16], strides = [1, 1]} : vector<8x96xf32> to vector<8x16xf32>
    %61 = arith.truncf %60 : vector<8x16xf32> to vector<8x16xbf16>
    %cst_22 = arith.constant dense<0.000000e+00> : vector<8x8xf32>
    %62 = tpu.matmul %57, %59, %cst_22 {dimension_numbers = #tpu.dot_dimension_numbers<[1], [1], [0], [0], [0, 0, 1, 0], [], []>} : vector<8x16xbf16>, vector<8x16xbf16>, vector<8x8xf32> -> vector<8x8xf32>
    %cst_23 = arith.constant 2.500000e-01 : f32
    %63 = vector.broadcast %cst_23 : f32 to vector<8x8xf32>
    %64 = arith.mulf %62, %63 : vector<8x8xf32>
    %65 = vector.broadcast %9 : vector<1x8xf32> to vector<8x8xf32>
    %66 = arith.addf %64, %65 : vector<8x8xf32>
    %cst_24 = arith.constant dense<0xFF800000> : vector<8xf32>
    %67 = vector.multi_reduction <maximumf>, %66, %cst_24 [1] : vector<8x8xf32> to vector<8xf32>
    %68 = vector.shape_cast %67 : vector<8xf32> to vector<8x1xf32>
    %69 = vector.broadcast %68 : vector<8x1xf32> to vector<8x8xf32>
    %70 = arith.subf %66, %69 : vector<8x8xf32>
    %71 = math.exp %70 : vector<8x8xf32>
    %cst_25 = arith.constant dense<0.000000e+00> : vector<8xf32>
    %72 = vector.multi_reduction <add>, %71, %cst_25 [1] : vector<8x8xf32> to vector<8xf32>
    %73 = vector.shape_cast %72 : vector<8xf32> to vector<8x1xf32>
    %74 = tpu.reciprocal %73 {approx = true} : vector<8x1xf32> -> vector<8x1xf32>
    %75 = vector.broadcast %74 : vector<8x1xf32> to vector<8x8xf32>
    %76 = arith.mulf %71, %75 : vector<8x8xf32>
    %77 = arith.truncf %76 : vector<8x8xf32> to vector<8x8xbf16>
    %cst_26 = arith.constant dense<0.000000e+00> : vector<8x16xf32>
    %78 = tpu.matmul %77, %61, %cst_26 {dimension_numbers = #tpu.dot_dimension_numbers<[1], [0], [0], [1], [0, 0, 1, 1], [], []>} : vector<8x8xbf16>, vector<8x16xbf16>, vector<8x16xf32> -> vector<8x16xf32>
    %79 = arith.truncf %78 : vector<8x16xf32> to vector<8x16xbf16>
    %80 = vector.extract_strided_slice %13 {offsets = [16, 0], sizes = [16, 32], strides = [1, 1]} : vector<32x32xbf16> to vector<16x32xbf16>
    %cst_27 = arith.constant dense<0.000000e+00> : vector<8x32xf32>
    %81 = tpu.matmul %79, %80, %cst_27 {dimension_numbers = #tpu.dot_dimension_numbers<[1], [0], [0], [1], [0, 0, 1, 1], [], []>} : vector<8x16xbf16>, vector<16x32xbf16>, vector<8x32xf32> -> vector<8x32xf32>
    %82 = arith.addf %55, %81 : vector<8x32xf32>
    %83 = vector.broadcast %19 : vector<1x32xf32> to vector<8x32xf32>
    %84 = arith.addf %82, %83 : vector<8x32xf32>
    %85 = arith.addf %1, %84 : vector<8x32xf32>
    %cst_28 = arith.constant dense<0.000000e+00> : vector<8xf32>
    %86 = vector.multi_reduction <add>, %85, %cst_28 [1] : vector<8x32xf32> to vector<8xf32>
    %87 = vector.shape_cast %86 : vector<8xf32> to vector<8x1xf32>
    %cst_29 = arith.constant 3.200000e+01 : f32
    %88 = vector.broadcast %cst_29 : f32 to vector<8x1xf32>
    %89 = arith.divf %87, %88 : vector<8x1xf32>
    %90 = vector.broadcast %89 : vector<8x1xf32> to vector<8x32xf32>
    %91 = arith.subf %85, %90 : vector<8x32xf32>
    %92 = arith.mulf %91, %91 : vector<8x32xf32>
    %cst_30 = arith.constant dense<0.000000e+00> : vector<8xf32>
    %93 = vector.multi_reduction <add>, %92, %cst_30 [1] : vector<8x32xf32> to vector<8xf32>
    %94 = vector.shape_cast %93 : vector<8xf32> to vector<8x1xf32>
    %cst_31 = arith.constant 3.200000e+01 : f32
    %95 = vector.broadcast %cst_31 : f32 to vector<8x1xf32>
    %96 = arith.divf %94, %95 : vector<8x1xf32>
    %cst_32 = arith.constant 9.99999996E-13 : f32
    %97 = vector.broadcast %cst_32 : f32 to vector<8x1xf32>
    %98 = arith.addf %96, %97 : vector<8x1xf32>
    %99 = math.rsqrt %98 : vector<8x1xf32>
    %100 = vector.broadcast %89 : vector<8x1xf32> to vector<8x32xf32>
    %101 = arith.subf %85, %100 : vector<8x32xf32>
    %102 = vector.broadcast %99 : vector<8x1xf32> to vector<8x32xf32>
    %103 = arith.mulf %101, %102 : vector<8x32xf32>
    %104 = vector.broadcast %20 : vector<1x32xf32> to vector<8x32xf32>
    %105 = arith.mulf %103, %104 : vector<8x32xf32>
    %106 = vector.broadcast %21 : vector<1x32xf32> to vector<8x32xf32>
    %107 = arith.addf %105, %106 : vector<8x32xf32>
    %108 = arith.truncf %107 : vector<8x32xf32> to vector<8x32xbf16>
    %cst_33 = arith.constant dense<0.000000e+00> : vector<8x64xf32>
    %109 = tpu.matmul %108, %14, %cst_33 {dimension_numbers = #tpu.dot_dimension_numbers<[1], [0], [0], [1], [0, 0, 1, 1], [], []>} : vector<8x32xbf16>, vector<32x64xbf16>, vector<8x64xf32> -> vector<8x64xf32>
    %110 = vector.broadcast %22 : vector<1x64xf32> to vector<8x64xf32>
    %111 = arith.addf %109, %110 : vector<8x64xf32>
    %112 = arith.mulf %111, %111 : vector<8x64xf32>
    %113 = arith.mulf %111, %112 : vector<8x64xf32>
    %cst_34 = arith.constant 4.471500e-02 : f32
    %114 = vector.broadcast %cst_34 : f32 to vector<8x64xf32>
    %115 = arith.mulf %114, %113 : vector<8x64xf32>
    %116 = arith.addf %111, %115 : vector<8x64xf32>
    %cst_35 = arith.constant 0.797884583 : f32
    %117 = vector.broadcast %cst_35 : f32 to vector<8x64xf32>
    %118 = arith.mulf %117, %116 : vector<8x64xf32>
    %119 = math.tanh %118 : vector<8x64xf32>
    %cst_36 = arith.constant 1.000000e+00 : f32
    %120 = vector.broadcast %cst_36 : f32 to vector<8x64xf32>
    %121 = arith.addf %120, %119 : vector<8x64xf32>
    %cst_37 = arith.constant 5.000000e-01 : f32
    %122 = vector.broadcast %cst_37 : f32 to vector<8x64xf32>
    %123 = arith.mulf %122, %121 : vector<8x64xf32>
    %124 = arith.mulf %111, %123 : vector<8x64xf32>
    %125 = arith.truncf %124 : vector<8x64xf32> to vector<8x64xbf16>
    %cst_38 = arith.constant dense<0.000000e+00> : vector<8x32xf32>
    %126 = tpu.matmul %125, %15, %cst_38 {dimension_numbers = #tpu.dot_dimension_numbers<[1], [0], [0], [1], [0, 0, 1, 1], [], []>} : vector<8x64xbf16>, vector<64x32xbf16>, vector<8x32xf32> -> vector<8x32xf32>
    %127 = vector.broadcast %23 : vector<1x32xf32> to vector<8x32xf32>
    %128 = arith.addf %126, %127 : vector<8x32xf32>
    %129 = arith.addf %107, %128 : vector<8x32xf32>
    %cst_39 = arith.constant dense<0.000000e+00> : vector<8xf32>
    %130 = vector.multi_reduction <add>, %129, %cst_39 [1] : vector<8x32xf32> to vector<8xf32>
    %131 = vector.shape_cast %130 : vector<8xf32> to vector<8x1xf32>
    %cst_40 = arith.constant 3.200000e+01 : f32
    %132 = vector.broadcast %cst_40 : f32 to vector<8x1xf32>
    %133 = arith.divf %131, %132 : vector<8x1xf32>
    %134 = vector.broadcast %133 : vector<8x1xf32> to vector<8x32xf32>
    %135 = arith.subf %129, %134 : vector<8x32xf32>
    %136 = arith.mulf %135, %135 : vector<8x32xf32>
    %cst_41 = arith.constant dense<0.000000e+00> : vector<8xf32>
    %137 = vector.multi_reduction <add>, %136, %cst_41 [1] : vector<8x32xf32> to vector<8xf32>
    %138 = vector.shape_cast %137 : vector<8xf32> to vector<8x1xf32>
    %cst_42 = arith.constant 3.200000e+01 : f32
    %139 = vector.broadcast %cst_42 : f32 to vector<8x1xf32>
    %140 = arith.divf %138, %139 : vector<8x1xf32>
    %cst_43 = arith.constant 9.99999996E-13 : f32
    %141 = vector.broadcast %cst_43 : f32 to vector<8x1xf32>
    %142 = arith.addf %140, %141 : vector<8x1xf32>
    %143 = math.rsqrt %142 : vector<8x1xf32>
    %144 = vector.broadcast %133 : vector<8x1xf32> to vector<8x32xf32>
    %145 = arith.subf %129, %144 : vector<8x32xf32>
    %146 = vector.broadcast %143 : vector<8x1xf32> to vector<8x32xf32>
    %147 = arith.mulf %145, %146 : vector<8x32xf32>
    %148 = vector.broadcast %24 : vector<1x32xf32> to vector<8x32xf32>
    %149 = arith.mulf %147, %148 : vector<8x32xf32>
    %150 = vector.broadcast %25 : vector<1x32xf32> to vector<8x32xf32>
    %151 = arith.addf %149, %150 : vector<8x32xf32>
    %c1 = arith.constant 1 : index
    %c0_44 = arith.constant 0 : index
    %c0_45 = arith.constant 0 : index
    %152 = vector.load %arg4[%c1, %c0_44, %c0_45] : memref<2x64x512xbf16, #tpu.memory_space<vmem>>, vector<1x64x512xbf16>
    %153 = vector.shape_cast %152 : vector<1x64x512xbf16> to vector<64x512xbf16>
    %154 = vector.extract_strided_slice %153 {offsets = [0, 0], sizes = [32, 96], strides = [1, 1]} : vector<64x512xbf16> to vector<32x96xbf16>
    %155 = vector.extract_strided_slice %153 {offsets = [0, 128], sizes = [32, 32], strides = [1, 1]} : vector<64x512xbf16> to vector<32x32xbf16>
    %156 = vector.extract_strided_slice %153 {offsets = [0, 256], sizes = [32, 64], strides = [1, 1]} : vector<64x512xbf16> to vector<32x64xbf16>
    %157 = vector.extract_strided_slice %153 {offsets = [0, 384], sizes = [64, 32], strides = [1, 1]} : vector<64x512xbf16> to vector<64x32xbf16>
    %c1_46 = arith.constant 1 : index
    %c0_47 = arith.constant 0 : index
    %c0_48 = arith.constant 0 : index
    %158 = vector.load %arg5[%c1_46, %c0_47, %c0_48] : memref<2x8x128xf32, #tpu.memory_space<vmem>>, vector<1x8x128xf32>
    %159 = vector.shape_cast %158 : vector<1x8x128xf32> to vector<8x128xf32>
    %160 = vector.extract_strided_slice %159 {offsets = [0, 0], sizes = [1, 96], strides = [1, 1]} : vector<8x128xf32> to vector<1x96xf32>
    %161 = vector.extract_strided_slice %159 {offsets = [1, 0], sizes = [1, 32], strides = [1, 1]} : vector<8x128xf32> to vector<1x32xf32>
    %162 = vector.extract_strided_slice %159 {offsets = [2, 0], sizes = [1, 32], strides = [1, 1]} : vector<8x128xf32> to vector<1x32xf32>
    %163 = vector.extract_strided_slice %159 {offsets = [3, 0], sizes = [1, 32], strides = [1, 1]} : vector<8x128xf32> to vector<1x32xf32>
    %164 = vector.extract_strided_slice %159 {offsets = [4, 0], sizes = [1, 64], strides = [1, 1]} : vector<8x128xf32> to vector<1x64xf32>
    %165 = vector.extract_strided_slice %159 {offsets = [5, 0], sizes = [1, 32], strides = [1, 1]} : vector<8x128xf32> to vector<1x32xf32>
    %166 = vector.extract_strided_slice %159 {offsets = [6, 0], sizes = [1, 32], strides = [1, 1]} : vector<8x128xf32> to vector<1x32xf32>
    %167 = vector.extract_strided_slice %159 {offsets = [7, 0], sizes = [1, 32], strides = [1, 1]} : vector<8x128xf32> to vector<1x32xf32>
    %168 = arith.truncf %151 : vector<8x32xf32> to vector<8x32xbf16>
    %cst_49 = arith.constant dense<0.000000e+00> : vector<8x96xf32>
    %169 = tpu.matmul %168, %154, %cst_49 {dimension_numbers = #tpu.dot_dimension_numbers<[1], [0], [0], [1], [0, 0, 1, 1], [], []>} : vector<8x32xbf16>, vector<32x96xbf16>, vector<8x96xf32> -> vector<8x96xf32>
    %170 = vector.broadcast %160 : vector<1x96xf32> to vector<8x96xf32>
    %171 = arith.addf %169, %170 : vector<8x96xf32>
    %172 = vector.extract_strided_slice %171 {offsets = [0, 0], sizes = [8, 16], strides = [1, 1]} : vector<8x96xf32> to vector<8x16xf32>
    %173 = arith.truncf %172 : vector<8x16xf32> to vector<8x16xbf16>
    %174 = vector.extract_strided_slice %171 {offsets = [0, 32], sizes = [8, 16], strides = [1, 1]} : vector<8x96xf32> to vector<8x16xf32>
    %175 = arith.truncf %174 : vector<8x16xf32> to vector<8x16xbf16>
    %176 = vector.extract_strided_slice %171 {offsets = [0, 64], sizes = [8, 16], strides = [1, 1]} : vector<8x96xf32> to vector<8x16xf32>
    %177 = arith.truncf %176 : vector<8x16xf32> to vector<8x16xbf16>
    %cst_50 = arith.constant dense<0.000000e+00> : vector<8x8xf32>
    %178 = tpu.matmul %173, %175, %cst_50 {dimension_numbers = #tpu.dot_dimension_numbers<[1], [1], [0], [0], [0, 0, 1, 0], [], []>} : vector<8x16xbf16>, vector<8x16xbf16>, vector<8x8xf32> -> vector<8x8xf32>
    %cst_51 = arith.constant 2.500000e-01 : f32
    %179 = vector.broadcast %cst_51 : f32 to vector<8x8xf32>
    %180 = arith.mulf %178, %179 : vector<8x8xf32>
    %181 = vector.broadcast %9 : vector<1x8xf32> to vector<8x8xf32>
    %182 = arith.addf %180, %181 : vector<8x8xf32>
    %cst_52 = arith.constant dense<0xFF800000> : vector<8xf32>
    %183 = vector.multi_reduction <maximumf>, %182, %cst_52 [1] : vector<8x8xf32> to vector<8xf32>
    %184 = vector.shape_cast %183 : vector<8xf32> to vector<8x1xf32>
    %185 = vector.broadcast %184 : vector<8x1xf32> to vector<8x8xf32>
    %186 = arith.subf %182, %185 : vector<8x8xf32>
    %187 = math.exp %186 : vector<8x8xf32>
    %cst_53 = arith.constant dense<0.000000e+00> : vector<8xf32>
    %188 = vector.multi_reduction <add>, %187, %cst_53 [1] : vector<8x8xf32> to vector<8xf32>
    %189 = vector.shape_cast %188 : vector<8xf32> to vector<8x1xf32>
    %190 = tpu.reciprocal %189 {approx = true} : vector<8x1xf32> -> vector<8x1xf32>
    %191 = vector.broadcast %190 : vector<8x1xf32> to vector<8x8xf32>
    %192 = arith.mulf %187, %191 : vector<8x8xf32>
    %193 = arith.truncf %192 : vector<8x8xf32> to vector<8x8xbf16>
    %cst_54 = arith.constant dense<0.000000e+00> : vector<8x16xf32>
    %194 = tpu.matmul %193, %177, %cst_54 {dimension_numbers = #tpu.dot_dimension_numbers<[1], [0], [0], [1], [0, 0, 1, 1], [], []>} : vector<8x8xbf16>, vector<8x16xbf16>, vector<8x16xf32> -> vector<8x16xf32>
    %195 = arith.truncf %194 : vector<8x16xf32> to vector<8x16xbf16>
    %196 = vector.extract_strided_slice %155 {offsets = [0, 0], sizes = [16, 32], strides = [1, 1]} : vector<32x32xbf16> to vector<16x32xbf16>
    %cst_55 = arith.constant dense<0.000000e+00> : vector<8x32xf32>
    %197 = tpu.matmul %195, %196, %cst_55 {dimension_numbers = #tpu.dot_dimension_numbers<[1], [0], [0], [1], [0, 0, 1, 1], [], []>} : vector<8x16xbf16>, vector<16x32xbf16>, vector<8x32xf32> -> vector<8x32xf32>
    %198 = vector.extract_strided_slice %171 {offsets = [0, 16], sizes = [8, 16], strides = [1, 1]} : vector<8x96xf32> to vector<8x16xf32>
    %199 = arith.truncf %198 : vector<8x16xf32> to vector<8x16xbf16>
    %200 = vector.extract_strided_slice %171 {offsets = [0, 48], sizes = [8, 16], strides = [1, 1]} : vector<8x96xf32> to vector<8x16xf32>
    %201 = arith.truncf %200 : vector<8x16xf32> to vector<8x16xbf16>
    %202 = vector.extract_strided_slice %171 {offsets = [0, 80], sizes = [8, 16], strides = [1, 1]} : vector<8x96xf32> to vector<8x16xf32>
    %203 = arith.truncf %202 : vector<8x16xf32> to vector<8x16xbf16>
    %cst_56 = arith.constant dense<0.000000e+00> : vector<8x8xf32>
    %204 = tpu.matmul %199, %201, %cst_56 {dimension_numbers = #tpu.dot_dimension_numbers<[1], [1], [0], [0], [0, 0, 1, 0], [], []>} : vector<8x16xbf16>, vector<8x16xbf16>, vector<8x8xf32> -> vector<8x8xf32>
    %cst_57 = arith.constant 2.500000e-01 : f32
    %205 = vector.broadcast %cst_57 : f32 to vector<8x8xf32>
    %206 = arith.mulf %204, %205 : vector<8x8xf32>
    %207 = vector.broadcast %9 : vector<1x8xf32> to vector<8x8xf32>
    %208 = arith.addf %206, %207 : vector<8x8xf32>
    %cst_58 = arith.constant dense<0xFF800000> : vector<8xf32>
    %209 = vector.multi_reduction <maximumf>, %208, %cst_58 [1] : vector<8x8xf32> to vector<8xf32>
    %210 = vector.shape_cast %209 : vector<8xf32> to vector<8x1xf32>
    %211 = vector.broadcast %210 : vector<8x1xf32> to vector<8x8xf32>
    %212 = arith.subf %208, %211 : vector<8x8xf32>
    %213 = math.exp %212 : vector<8x8xf32>
    %cst_59 = arith.constant dense<0.000000e+00> : vector<8xf32>
    %214 = vector.multi_reduction <add>, %213, %cst_59 [1] : vector<8x8xf32> to vector<8xf32>
    %215 = vector.shape_cast %214 : vector<8xf32> to vector<8x1xf32>
    %216 = tpu.reciprocal %215 {approx = true} : vector<8x1xf32> -> vector<8x1xf32>
    %217 = vector.broadcast %216 : vector<8x1xf32> to vector<8x8xf32>
    %218 = arith.mulf %213, %217 : vector<8x8xf32>
    %219 = arith.truncf %218 : vector<8x8xf32> to vector<8x8xbf16>
    %cst_60 = arith.constant dense<0.000000e+00> : vector<8x16xf32>
    %220 = tpu.matmul %219, %203, %cst_60 {dimension_numbers = #tpu.dot_dimension_numbers<[1], [0], [0], [1], [0, 0, 1, 1], [], []>} : vector<8x8xbf16>, vector<8x16xbf16>, vector<8x16xf32> -> vector<8x16xf32>
    %221 = arith.truncf %220 : vector<8x16xf32> to vector<8x16xbf16>
    %222 = vector.extract_strided_slice %155 {offsets = [16, 0], sizes = [16, 32], strides = [1, 1]} : vector<32x32xbf16> to vector<16x32xbf16>
    %cst_61 = arith.constant dense<0.000000e+00> : vector<8x32xf32>
    %223 = tpu.matmul %221, %222, %cst_61 {dimension_numbers = #tpu.dot_dimension_numbers<[1], [0], [0], [1], [0, 0, 1, 1], [], []>} : vector<8x16xbf16>, vector<16x32xbf16>, vector<8x32xf32> -> vector<8x32xf32>
    %224 = arith.addf %197, %223 : vector<8x32xf32>
    %225 = vector.broadcast %161 : vector<1x32xf32> to vector<8x32xf32>
    %226 = arith.addf %224, %225 : vector<8x32xf32>
    %227 = arith.addf %151, %226 : vector<8x32xf32>
    %cst_62 = arith.constant dense<0.000000e+00> : vector<8xf32>
    %228 = vector.multi_reduction <add>, %227, %cst_62 [1] : vector<8x32xf32> to vector<8xf32>
    %229 = vector.shape_cast %228 : vector<8xf32> to vector<8x1xf32>
    %cst_63 = arith.constant 3.200000e+01 : f32
    %230 = vector.broadcast %cst_63 : f32 to vector<8x1xf32>
    %231 = arith.divf %229, %230 : vector<8x1xf32>
    %232 = vector.broadcast %231 : vector<8x1xf32> to vector<8x32xf32>
    %233 = arith.subf %227, %232 : vector<8x32xf32>
    %234 = arith.mulf %233, %233 : vector<8x32xf32>
    %cst_64 = arith.constant dense<0.000000e+00> : vector<8xf32>
    %235 = vector.multi_reduction <add>, %234, %cst_64 [1] : vector<8x32xf32> to vector<8xf32>
    %236 = vector.shape_cast %235 : vector<8xf32> to vector<8x1xf32>
    %cst_65 = arith.constant 3.200000e+01 : f32
    %237 = vector.broadcast %cst_65 : f32 to vector<8x1xf32>
    %238 = arith.divf %236, %237 : vector<8x1xf32>
    %cst_66 = arith.constant 9.99999996E-13 : f32
    %239 = vector.broadcast %cst_66 : f32 to vector<8x1xf32>
    %240 = arith.addf %238, %239 : vector<8x1xf32>
    %241 = math.rsqrt %240 : vector<8x1xf32>
    %242 = vector.broadcast %231 : vector<8x1xf32> to vector<8x32xf32>
    %243 = arith.subf %227, %242 : vector<8x32xf32>
    %244 = vector.broadcast %241 : vector<8x1xf32> to vector<8x32xf32>
    %245 = arith.mulf %243, %244 : vector<8x32xf32>
    %246 = vector.broadcast %162 : vector<1x32xf32> to vector<8x32xf32>
    %247 = arith.mulf %245, %246 : vector<8x32xf32>
    %248 = vector.broadcast %163 : vector<1x32xf32> to vector<8x32xf32>
    %249 = arith.addf %247, %248 : vector<8x32xf32>
    %250 = arith.truncf %249 : vector<8x32xf32> to vector<8x32xbf16>
    %cst_67 = arith.constant dense<0.000000e+00> : vector<8x64xf32>
    %251 = tpu.matmul %250, %156, %cst_67 {dimension_numbers = #tpu.dot_dimension_numbers<[1], [0], [0], [1], [0, 0, 1, 1], [], []>} : vector<8x32xbf16>, vector<32x64xbf16>, vector<8x64xf32> -> vector<8x64xf32>
    %252 = vector.broadcast %164 : vector<1x64xf32> to vector<8x64xf32>
    %253 = arith.addf %251, %252 : vector<8x64xf32>
    %254 = arith.mulf %253, %253 : vector<8x64xf32>
    %255 = arith.mulf %253, %254 : vector<8x64xf32>
    %cst_68 = arith.constant 4.471500e-02 : f32
    %256 = vector.broadcast %cst_68 : f32 to vector<8x64xf32>
    %257 = arith.mulf %256, %255 : vector<8x64xf32>
    %258 = arith.addf %253, %257 : vector<8x64xf32>
    %cst_69 = arith.constant 0.797884583 : f32
    %259 = vector.broadcast %cst_69 : f32 to vector<8x64xf32>
    %260 = arith.mulf %259, %258 : vector<8x64xf32>
    %261 = math.tanh %260 : vector<8x64xf32>
    %cst_70 = arith.constant 1.000000e+00 : f32
    %262 = vector.broadcast %cst_70 : f32 to vector<8x64xf32>
    %263 = arith.addf %262, %261 : vector<8x64xf32>
    %cst_71 = arith.constant 5.000000e-01 : f32
    %264 = vector.broadcast %cst_71 : f32 to vector<8x64xf32>
    %265 = arith.mulf %264, %263 : vector<8x64xf32>
    %266 = arith.mulf %253, %265 : vector<8x64xf32>
    %267 = arith.truncf %266 : vector<8x64xf32> to vector<8x64xbf16>
    %cst_72 = arith.constant dense<0.000000e+00> : vector<8x32xf32>
    %268 = tpu.matmul %267, %157, %cst_72 {dimension_numbers = #tpu.dot_dimension_numbers<[1], [0], [0], [1], [0, 0, 1, 1], [], []>} : vector<8x64xbf16>, vector<64x32xbf16>, vector<8x32xf32> -> vector<8x32xf32>
    %269 = vector.broadcast %165 : vector<1x32xf32> to vector<8x32xf32>
    %270 = arith.addf %268, %269 : vector<8x32xf32>
    %271 = arith.addf %249, %270 : vector<8x32xf32>
    %cst_73 = arith.constant dense<0.000000e+00> : vector<8xf32>
    %272 = vector.multi_reduction <add>, %271, %cst_73 [1] : vector<8x32xf32> to vector<8xf32>
    %273 = vector.shape_cast %272 : vector<8xf32> to vector<8x1xf32>
    %cst_74 = arith.constant 3.200000e+01 : f32
    %274 = vector.broadcast %cst_74 : f32 to vector<8x1xf32>
    %275 = arith.divf %273, %274 : vector<8x1xf32>
    %276 = vector.broadcast %275 : vector<8x1xf32> to vector<8x32xf32>
    %277 = arith.subf %271, %276 : vector<8x32xf32>
    %278 = arith.mulf %277, %277 : vector<8x32xf32>
    %cst_75 = arith.constant dense<0.000000e+00> : vector<8xf32>
    %279 = vector.multi_reduction <add>, %278, %cst_75 [1] : vector<8x32xf32> to vector<8xf32>
    %280 = vector.shape_cast %279 : vector<8xf32> to vector<8x1xf32>
    %cst_76 = arith.constant 3.200000e+01 : f32
    %281 = vector.broadcast %cst_76 : f32 to vector<8x1xf32>
    %282 = arith.divf %280, %281 : vector<8x1xf32>
    %cst_77 = arith.constant 9.99999996E-13 : f32
    %283 = vector.broadcast %cst_77 : f32 to vector<8x1xf32>
    %284 = arith.addf %282, %283 : vector<8x1xf32>
    %285 = math.rsqrt %284 : vector<8x1xf32>
    %286 = vector.broadcast %275 : vector<8x1xf32> to vector<8x32xf32>
    %287 = arith.subf %271, %286 : vector<8x32xf32>
    %288 = vector.broadcast %285 : vector<8x1xf32> to vector<8x32xf32>
    %289 = arith.mulf %287, %288 : vector<8x32xf32>
    %290 = vector.broadcast %166 : vector<1x32xf32> to vector<8x32xf32>
    %291 = arith.mulf %289, %290 : vector<8x32xf32>
    %292 = vector.broadcast %167 : vector<1x32xf32> to vector<8x32xf32>
    %293 = arith.addf %291, %292 : vector<8x32xf32>
    %294 = vector.broadcast %5 : vector<8x1xf32> to vector<8x32xf32>
    %295 = arith.mulf %293, %294 : vector<8x32xf32>
    %cst_78 = arith.constant dense<0.000000e+00> : vector<32xf32>
    %296 = vector.multi_reduction <add>, %295, %cst_78 [0] : vector<8x32xf32> to vector<32xf32>
    %297 = vector.shape_cast %296 : vector<32xf32> to vector<1x32xf32>
    %cst_79 = arith.constant dense<0.000000e+00> : vector<1xf32>
    %298 = vector.multi_reduction <add>, %5, %cst_79 [0] : vector<8x1xf32> to vector<1xf32>
    %299 = vector.shape_cast %298 : vector<1xf32> to vector<1x1xf32>
    %cst_80 = arith.constant 1.000000e+00 : f32
    %300 = vector.broadcast %cst_80 : f32 to vector<1x1xf32>
    %301 = arith.maximumf %299, %300 : vector<1x1xf32>
    %302 = vector.broadcast %301 : vector<1x1xf32> to vector<1x32xf32>
    %303 = arith.divf %297, %302 : vector<1x32xf32>
    %c0_81 = arith.constant 0 : index
    %c0_82 = arith.constant 0 : index
    %c0_83 = arith.constant 0 : index
    %304 = vector.load %arg6[%c0_81, %c0_82, %c0_83] : memref<1x1x32xf32, #tpu.memory_space<vmem>>, vector<1x1x32xf32>
    %305 = vector.shape_cast %304 : vector<1x1x32xf32> to vector<1x32xf32>
    %306 = vector.shape_cast %303 : vector<1x32xf32> to vector<1x1x32xf32>
    tpu.vector_store %arg6[%c0_81, %c0_82, %c0_83], %306 {strides = array<i32>} : memref<1x1x32xf32, #tpu.memory_space<vmem>>, vector<1x1x32xf32>,
    return
  }
  func.func @transform_0(%arg0: i32) -> (i32, i32, i32) {
    %c0_i32 = arith.constant 0 : i32
    %c0_i32_0 = arith.constant 0 : i32
    %c0_i32_1 = arith.constant 0 : i32
    return %arg0, %c0_i32, %c0_i32_0 : i32, i32, i32
  }
  func.func @transform_1(%arg0: i32) -> (i32, i32, i32) {
    %c0_i32 = arith.constant 0 : i32
    %c0_i32_0 = arith.constant 0 : i32
    %c0_i32_1 = arith.constant 0 : i32
    return %arg0, %c0_i32, %c0_i32_0 : i32, i32, i32
  }
  func.func @transform_2(%arg0: i32) -> (i32, i32, i32) {
    %c0_i32 = arith.constant 0 : i32
    %c0_i32_0 = arith.constant 0 : i32
    %c0_i32_1 = arith.constant 0 : i32
    return %arg0, %c0_i32, %c0_i32_0 : i32, i32, i32
  }
  func.func @transform_3(%arg0: i32) -> (i32, i32, i32) {
    %c0_i32 = arith.constant 0 : i32
    %c0_i32_0 = arith.constant 0 : i32
    %c0_i32_1 = arith.constant 0 : i32
    %c0_i32_2 = arith.constant 0 : i32
    return %c0_i32, %c0_i32_0, %c0_i32_1 : i32, i32, i32
  }
  func.func @transform_4(%arg0: i32) -> (i32, i32, i32) {
    %c0_i32 = arith.constant 0 : i32
    %c0_i32_0 = arith.constant 0 : i32
    %c0_i32_1 = arith.constant 0 : i32
    %c0_i32_2 = arith.constant 0 : i32
    return %c0_i32, %c0_i32_0, %c0_i32_1 : i32, i32, i32
  }
  func.func @transform_5(%arg0: i32) -> (i32, i32, i32) {
    %c0_i32 = arith.constant 0 : i32
    %c0_i32_0 = arith.constant 0 : i32
    %c0_i32_1 = arith.constant 0 : i32
    return %arg0, %c0_i32, %c0_i32_0 : i32, i32, i32
  }
}

</mosaic_0001>

<llo_original>
// kernel: tpu_custom_call.1
$region0: #{tpu_custom_call.1}
  #allocation0 [shape = 'u32[]', space=smem, size = 0x4, offset = 0x4, fixed_abs, tag = 'smem constant byte address 0x4 - core index']
  #allocation1 [shape = 'u32[144,128]{1,0:T(1,128)}', space=vmem, size = 0x12000, scoped, tag = 'internal scratch']
  %s0 = inlined_call_operand.vmem [shape: f32[2,8,32], index: 0, kind: input, shape index: {}]
  %s1 = inlined_call_operand.vmem [shape: f32[2,1,8], index: 1, kind: input, shape index: {}]
  %s2 = inlined_call_operand.vmem [shape: f32[2,8,1], index: 2, kind: input, shape index: {}]
  %s3 = inlined_call_operand.hbm [shape: bf16[2,64,512], index: 3, kind: input, shape index: {}]
  %s4 = inlined_call_operand.hbm [shape: f32[2,8,128], index: 4, kind: input, shape index: {}]
  %s5 = inlined_call_operand.hbm [shape: f32[2,1,32], index: 5, kind: output, shape index: {}]
  %s6 = sld [smem:[#allocation0]]
  $region61: #{tpu_custom_call.1} parent=0
    _
  %s8 = ssub.s32 1, %s6
  %s9 = scalar_select 0, %s8, %s6
  $region1: #{tpu_custom_call.1} parent=0
    #allocation2 [shape = 'u8[131072]{0}', space=vmem, size = 0x20000, scoped, tag = 'input window, operand 3, single buffered']
    #allocation3 [shape = 's32[2]{0}', space=sflag, size = 0x8, scoped, tag = 'scoped memory for tpu_custom_call.1']
    #allocation4 [shape = 's32[2]{0}', space=sflag, size = 0x8, scoped, tag = 'scoped memory for tpu_custom_call.1']
    #allocation5 [shape = 'u8[8192]{0}', space=vmem, size = 0x2000, scoped, tag = 'input window, operand 4, single buffered']
    #allocation6 [shape = 's32[1]{0}', space=sflag, size = 0x4, scoped, tag = 'scoped memory for tpu_custom_call.1']
    #allocation7 [shape = 'u8[1024]{0}', space=vmem, size = 0x400, scoped, tag = 'output window, operand 0']
    %10 = vsyncpa [#allocation3], 0
    %11 = vsyncpa [#allocation6], 0
    %12 = vsyncpa [#allocation4], 0
    %s13 = scalar_lea.sflag [#allocation4], 1
    %14 = vsyncpa %s13, 0
    loop: start=0, step=1, limit=4
    $region2: #{tpu_custom_call.1} parent=1 // loop_pre_header
      _
    $region3: #{tpu_custom_call.1} parent=1 // loop_header
      %s16 = sphi 0, %s20
      %p17 = scmp.ge.s32.totalorder %s16, 4
      %s26 = sphi 0, %s28
      %s29 = sphi 0, %s26
      %s30 = sphi 0, %s29
      %s46 = sphi 0, %s30
      %s52 = sphi 0, %s54
      %s55 = sphi 0, %s52
      %s56 = sphi 0, %s55
      %s72 = sphi 0, %s56
      %s78 = sphi 0, %s80
      %s81 = sphi 0, %s78
      %s82 = sphi 0, %s81
      %s98 = sphi 0, %s82
      %s102 = sphi 0, %s102
      %s104 = sphi 0, %s102
      %s105 = sphi 0, %s104
      %s119 = sphi 0, %s105
      %s123 = sphi 0, %s123
      %s125 = sphi 0, %s123
      %s126 = sphi 0, %s125
      %s140 = sphi 0, %s126
      %s146 = sphi 0, %s148
      %s149 = sphi 0, %s146
      %s150 = sphi 0, %s149
      %s166 = sphi 0, %s150
    $region4: #{tpu_custom_call.1} parent=1 // loop_header_branch
      %19 = sbr.rel (%p17) target = $region8
    $region5: #{tpu_custom_call.1} parent=1 // loop_body
      %s21 = ssub.s32 %s16, 1
      %s22 = ssub.s32 %s16, 2
      %s23 = sadd.s32 %s16, 1
      %s24 = ssub.s32 %s16, %s23
      %p25 = scmp.eq.s32.totalorder %s24, 0
      %s27 = sadd.s32 %s26, 1
      %s28 = scalar_select %p25, %s26, %s27
      %p31 = pneg %p25
      %p32 = scmp.eq.s32.totalorder %s16, 1
      %p33 = por %p31, %p32
      %p34 = scmp.ne.s32.totalorder %s26, %s29
      %p35 = scmp.eq.s32.totalorder %s16, 0
      %p36 = por %p34, %p35
      %p37 = scmp.ne.s32.totalorder %s26, %s29
      %p38 = scmp.eq.s32.totalorder %s21, 1
      %p39 = por %p37, %p38
      %p40 = scmp.ne.s32.totalorder %s29, %s30
      %p41 = scmp.eq.s32.totalorder %s21, 0
      %p42 = por %p40, %p41
      %p43 = scmp.ne.s32.totalorder %s29, %s30
      %p44 = scmp.eq.s32.totalorder %s22, 1
      %p45 = por %p43, %p44
      %p47 = scmp.ne.s32.totalorder %s30, %s46
      %p48 = scmp.eq.s32.totalorder %s22, 0
      %p49 = por %p47, %p48
      %s50 = ssub.s32 %s16, %s23
      %p51 = scmp.eq.s32.totalorder %s50, 0
      %s53 = sadd.s32 %s52, 1
      %s54 = scalar_select %p51, %s52, %s53
      %p57 = pneg %p51
      %p58 = scmp.eq.s32.totalorder %s16, 1
      %p59 = por %p57, %p58
      %p60 = scmp.ne.s32.totalorder %s52, %s55
      %p61 = scmp.eq.s32.totalorder %s16, 0
      %p62 = por %p60, %p61
      %p63 = scmp.ne.s32.totalorder %s52, %s55
      %p64 = scmp.eq.s32.totalorder %s21, 1
      %p65 = por %p63, %p64
      %p66 = scmp.ne.s32.totalorder %s55, %s56
      %p67 = scmp.eq.s32.totalorder %s21, 0
      %p68 = por %p66, %p67
      %p69 = scmp.ne.s32.totalorder %s55, %s56
      %p70 = scmp.eq.s32.totalorder %s22, 1
      %p71 = por %p69, %p70
      %p73 = scmp.ne.s32.totalorder %s56, %s72
      %p74 = scmp.eq.s32.totalorder %s22, 0
      %p75 = por %p73, %p74
      %s76 = ssub.s32 %s16, %s23
      %p77 = scmp.eq.s32.totalorder %s76, 0
      %s79 = sadd.s32 %s78, 1
      %s80 = scalar_select %p77, %s78, %s79
      %p83 = pneg %p77
      %p84 = scmp.eq.s32.totalorder %s16, 1
      %p85 = por %p83, %p84
      %p86 = scmp.ne.s32.totalorder %s78, %s81
      %p87 = scmp.eq.s32.totalorder %s16, 0
      %p88 = por %p86, %p87
      %p89 = scmp.ne.s32.totalorder %s78, %s81
      %p90 = scmp.eq.s32.totalorder %s21, 1
      %p91 = por %p89, %p90
      %p92 = scmp.ne.s32.totalorder %s81, %s82
      %p93 = scmp.eq.s32.totalorder %s21, 0
      %p94 = por %p92, %p93
      %p95 = scmp.ne.s32.totalorder %s81, %s82
      %p96 = scmp.eq.s32.totalorder %s22, 1
      %p97 = por %p95, %p96
      %p99 = scmp.ne.s32.totalorder %s82, %s98
      %p100 = scmp.eq.s32.totalorder %s22, 0
      %p101 = por %p99, %p100
      %s103 = sadd.s32 %s102, 1
      %p106 = scmp.eq.s32.totalorder %s16, 1
      %p107 = scmp.ne.s32.totalorder %s102, %s104
      %p108 = scmp.eq.s32.totalorder %s16, 0
      %p109 = por %p107, %p108
      %p110 = scmp.ne.s32.totalorder %s102, %s104
      %p111 = scmp.eq.s32.totalorder %s21, 1
      %p112 = por %p110, %p111
      %p113 = scmp.ne.s32.totalorder %s104, %s105
      %p114 = scmp.eq.s32.totalorder %s21, 0
      %p115 = por %p113, %p114
      %p116 = scmp.ne.s32.totalorder %s104, %s105
      %p117 = scmp.eq.s32.totalorder %s22, 1
      %p118 = por %p116, %p117
      %p120 = scmp.ne.s32.totalorder %s105, %s119
      %p121 = scmp.eq.s32.totalorder %s22, 0
      %p122 = por %p120, %p121
      %s124 = sadd.s32 %s123, 1
      %p127 = scmp.eq.s32.totalorder %s16, 1
      %p128 = scmp.ne.s32.totalorder %s123, %s125
      %p129 = scmp.eq.s32.totalorder %s16, 0
      %p130 = por %p128, %p129
      %p131 = scmp.ne.s32.totalorder %s123, %s125
      %p132 = scmp.eq.s32.totalorder %s21, 1
      %p133 = por %p131, %p132
      %p134 = scmp.ne.s32.totalorder %s125, %s126
      %p135 = scmp.eq.s32.totalorder %s21, 0
      %p136 = por %p134, %p135
      %p137 = scmp.ne.s32.totalorder %s125, %s126
      %p138 = scmp.eq.s32.totalorder %s22, 1
      %p139 = por %p137, %p138
      %p141 = scmp.ne.s32.totalorder %s126, %s140
      %p142 = scmp.eq.s32.totalorder %s22, 0
      %p143 = por %p141, %p142
      %s144 = ssub.s32 %s16, %s23
      %p145 = scmp.eq.s32.totalorder %s144, 0
      %s147 = sadd.s32 %s146, 1
      %s148 = scalar_select %p145, %s146, %s147
      %p151 = pneg %p145
      %p152 = scmp.eq.s32.totalorder %s16, 1
      %p153 = por %p151, %p152
      %p154 = scmp.ne.s32.totalorder %s146, %s149
      %p155 = scmp.eq.s32.totalorder %s16, 0
      %p156 = por %p154, %p155
      %p157 = scmp.ne.s32.totalorder %s146, %s149
      %p158 = scmp.eq.s32.totalorder %s21, 1
      %p159 = por %p157, %p158
      %p160 = scmp.ne.s32.totalorder %s149, %s150
      %p161 = scmp.eq.s32.totalorder %s21, 0
      %p162 = por %p160, %p161
      %p163 = scmp.ne.s32.totalorder %s149, %s150
      %p164 = scmp.eq.s32.totalorder %s22, 1
      %p165 = por %p163, %p164
      %p167 = scmp.ne.s32.totalorder %s150, %s166
      %p168 = scmp.eq.s32.totalorder %s22, 0
      %p169 = por %p167, %p168
      %p170 = scmp.le.s32.totalorder 1, %s16
      %p171 = scmp.lt.s32.totalorder %s16, 3
      %p172 = pnand %p170, %p171
      %p173 = pneg %p172
      // Predicated region
      $region9: #{tpu_custom_call.1} parent=5 // pred_check
        _
      $region10: #{tpu_custom_call.1} parent=5 // pred_check_branch
        %175 = sbr.rel (%p172) target = $region12
      $region11: #{tpu_custom_call.1} parent=5 // pred_region
        %s176 = ssub.s32 %s16, 1
        // Predicated region
        $region13: #{tpu_custom_call.1} parent=11 // pred_check
          %p177 = pneg %p115
        $region14: #{tpu_custom_call.1} parent=11 // pred_check_branch
          %179 = sbr.rel (%p177) target = $region16
        $region15: #{tpu_custom_call.1} parent=11 // pred_region
          %s181 = ssub.s32 4096, 4096
          %182 = vsyncadd [#allocation3], %s181
          %s183 = sshll.u32 [#allocation2], 4
          %s184 = int_to_ptr.vmem [resolvable:$true] %s183
          %189 = dma.hbm_to_vmem [thread:$0]  %s3, 4096, %s184, [#allocation3], 256, 256, 16
        $region16: #{tpu_custom_call.1} parent=11 // pred_fallthru
          _
        // Predicated region
        $region17: #{tpu_custom_call.1} parent=11 // pred_check
          %p190 = pneg %p136
        $region18: #{tpu_custom_call.1} parent=11 // pred_check_branch
          %192 = sbr.rel (%p190) target = $region20
        $region19: #{tpu_custom_call.1} parent=11 // pred_region
          %s194 = ssub.s32 256, 256
          %195 = vsyncadd [#allocation6], %s194
          %s196 = sshll.u32 [#allocation5], 4
          %s197 = int_to_ptr.vmem [resolvable:$true] %s196
          %202 = dma.hbm_to_vmem [thread:$0]  %s4, 256, %s197, [#allocation6], 128, 128, 8
        $region20: #{tpu_custom_call.1} parent=11 // pred_fallthru
          _
      $region12: #{tpu_custom_call.1} parent=5 // pred_fallthru
        _
      %p203 = scmp.lt.s32.totalorder %s16, 2
      // Predicated region
      $region21: #{tpu_custom_call.1} parent=5 // pred_check
        %p204 = pneg %p203
      $region22: #{tpu_custom_call.1} parent=5 // pred_check_branch
        %206 = sbr.rel (%p204) target = $region24
      $region23: #{tpu_custom_call.1} parent=5 // pred_region
        // Predicated region
        $region25: #{tpu_custom_call.1} parent=23 // pred_check
          %p207 = pneg %p36
        $region26: #{tpu_custom_call.1} parent=23 // pred_check_branch
          %209 = sbr.rel (%p207) target = $region28
        $region27: #{tpu_custom_call.1} parent=23 // pred_region
          %p210 = scmp.lt.s32.totalorder %s16, 1
          %s211 = scalar_select %p210, %s16, 1
          %s212 = smul.addr %s211, 8
          %s213 = scalar_lea.vmem %s0, %s212
        $region28: #{tpu_custom_call.1} parent=23 // pred_fallthru
          _
        // Predicated region
        $region29: #{tpu_custom_call.1} parent=23 // pred_check
          %p214 = pneg %p62
        $region30: #{tpu_custom_call.1} parent=23 // pred_check_branch
          %216 = sbr.rel (%p214) target = $region32
        $region31: #{tpu_custom_call.1} parent=23 // pred_region
          %p217 = scmp.lt.s32.totalorder %s16, 1
          %s218 = scalar_select %p217, %s16, 1
          %s219 = scalar_lea.vmem %s1, %s218
        $region32: #{tpu_custom_call.1} parent=23 // pred_fallthru
          _
        // Predicated region
        $region33: #{tpu_custom_call.1} parent=23 // pred_check
          %p220 = pneg %p88
        $region34: #{tpu_custom_call.1} parent=23 // pred_check_branch
          %222 = sbr.rel (%p220) target = $region36
        $region35: #{tpu_custom_call.1} parent=23 // pred_region
          %p223 = scmp.lt.s32.totalorder %s16, 1
          %s224 = scalar_select %p223, %s16, 1
          %s225 = smul.addr %s224, 8
          %s226 = scalar_lea.vmem %s2, %s225
        $region36: #{tpu_custom_call.1} parent=23 // pred_fallthru
          _
      $region24: #{tpu_custom_call.1} parent=5 // pred_fallthru
        _
      %p227 = scmp.le.s32.totalorder 1, %s16
      %p228 = scmp.lt.s32.totalorder %s16, 3
      %p229 = pnand %p227, %p228
      %p230 = pneg %p229
      // Predicated region
      $region37: #{tpu_custom_call.1} parent=5 // pred_check
        _
      $region38: #{tpu_custom_call.1} parent=5 // pred_check_branch
        %232 = sbr.rel (%p229) target = $region40
      $region39: #{tpu_custom_call.1} parent=5 // pred_region
        %s233 = ssub.s32 %s16, 1
        // Predicated region
        $region41: #{tpu_custom_call.1} parent=39 // pred_check
          %p234 = pneg %p115
        $region42: #{tpu_custom_call.1} parent=39 // pred_check_branch
          %236 = sbr.rel (%p234) target = $region44
        $region43: #{tpu_custom_call.1} parent=39 // pred_region
          %237 = dma.done [#allocation3], 4096
        $region44: #{tpu_custom_call.1} parent=39 // pred_fallthru
          _
        // Predicated region
        $region45: #{tpu_custom_call.1} parent=39 // pred_check
          %p238 = pneg %p136
        $region46: #{tpu_custom_call.1} parent=39 // pred_check_branch
          %240 = sbr.rel (%p238) target = $region48
        $region47: #{tpu_custom_call.1} parent=39 // pred_region
          %241 = dma.done [#allocation6], 256
        $region48: #{tpu_custom_call.1} parent=39 // pred_fallthru
          _
        %p242 = scmp.lt.s32.totalorder %s21, 1
        %s243 = scalar_select %p242, %s21, 1
        %s244 = smul.addr %s243, 8
        %s245 = scalar_lea.vmem %s0, %s244
        %p246 = pneg %p42
        %p247 = pneg %p39
        %p248 = scmp.lt.s32.totalorder %s21, 1
        %s249 = scalar_select %p248, %s21, 1
        %s250 = scalar_lea.vmem %s1, %s249
        %p251 = pneg %p68
        %p252 = pneg %p65
        %p253 = scmp.lt.s32.totalorder %s21, 1
        %s254 = scalar_select %p253, %s21, 1
        %s255 = smul.addr %s254, 8
        %s256 = scalar_lea.vmem %s2, %s255
        %p257 = pneg %p94
        %p258 = pneg %p91
        %p259 = pneg %p115
        %p260 = pneg %p112
        %p261 = pneg %p136
        %p262 = pneg %p133
        %p263 = pneg %p162
        %p264 = pneg %p159
        %s265 = sand.u32 %s149, 1
        %s266 = scalar_lea.sflag [#allocation4], %s265
        %s267 = sand.u32 %s149, 1
        %s268 = scalar_lea.vmem [#allocation7], %s267
        %p269 = scmp.lt.s32.totalorder %s21, 1
        %s270 = scalar_select %p269, %s21, 1
        %s271 = smul.addr %s270, 8
        %s272 = scalar_lea.vmem %s0, %s271
        %p273 = scmp.lt.s32.totalorder %s21, 1
        %s274 = scalar_select %p273, %s21, 1
        %s275 = scalar_lea.vmem %s1, %s274
        %p276 = scmp.lt.s32.totalorder %s21, 1
        %s277 = scalar_select %p276, %s21, 1
        %s278 = smul.addr %s277, 8
        %s279 = scalar_lea.vmem %s2, %s278
        %v281 = vld [vmem:[%s272] sm:$0xff]
        %v282 = vld [vmem:[%s275] sm:$0x1]
        %v283 = vld [vmem:[%s279] sm:$0xff]
        %v284 = vsub.f32 1.0, %v282
        %v285 = vmul.f32 %v284, -1e+09
        %v286 = vld [vmem:[#allocation2] sm:$0xff]
        %v287 = vld [vmem:[#allocation2 + $0x8] sm:$0xff]
        %v288 = vld [vmem:[#allocation2 + $0x10] sm:$0xff]
        %v289 = vld [vmem:[#allocation2 + $0x18] sm:$0xff]
        %v290 = vld [vmem:[#allocation2 + $0x20] sm:$0xff]
        %v291 = vld [vmem:[#allocation2 + $0x28] sm:$0xff]
        %v292 = vld [vmem:[#allocation2 + $0x30] sm:$0xff]
        %v293 = vld [vmem:[#allocation2 + $0x38] sm:$0xff]
        %v294 = vld [vmem:[#allocation2 + $0x48] sm:$0xff]
        %v295 = vld [vmem:[#allocation2 + $0x58] sm:$0xff]
        %v296 = vld [vmem:[#allocation2 + $0x68] sm:$0xff]
        %v297 = vld [vmem:[#allocation2 + $0x78] sm:$0xff]
        %v298 = vld [vmem:[#allocation5] sm:$0xff]
        %v299 = vpack.c.bf16 %v281, %v281
        %v300 = vlaneseq
        %v301 = vshrl.u32 %v300, 7
        %v302 = vsub.s32 0, %v301
        %v303 = vrot.slane %v298, %v302
        %v308 = vunpack.c.l.b16 %v286
        %v309 = vunpack.c.l.b16 %v288
        %v310 = vunpack.c.l.b16 %v290
        %v311 = vunpack.c.l.b16 %v292
        %v312 = vpack.c.b16 %v309, %v308
        %v313 = vpack.c.b16 %v311, %v310
        %vm316 = vcmask 261120
        %v318 = vsel %vm316, %v299, 0
        %320 = vmatprep.subr.bf16.mxu0 0
        %321 = vmatpush1.bf16.msra.mxu0 0
        %322 = vmatprep.subr.bf16.mxu0 0
        %323 = vmatpush1.bf16.msra.mxu0 0
        %324 = vmatprep.subr.bf16.mxu0 0
        %325 = vmatpush1.bf16.msra.mxu0 0
        %326 = vmatprep.subr.bf16.mxu0 0
        %327 = vmatpush1.bf16.msra.mxu0 0
        %328 = vmatprep.subr.bf16.mxu0 0
        %329 = vmatpush1.bf16.msra.mxu0 0
        %330 = vmatprep.subr.bf16.mxu0 0
        %331 = vmatpush1.bf16.msra.mxu0 0
        %332 = vmatprep.subr.bf16.mxu0 0
        %333 = vmatpush1.bf16.msra.mxu0 %v313
        %334 = vmatprep.subr.bf16.mxu0 0
        %335 = vmatpush1.bf16.msra.mxu0 %v312
        %336 = vmatprep.subr.bf16.mxu0 0
        %337 = vmatpush2.bf16.msra.mxu0 0
        %338 = vmatprep.subr.bf16.mxu0 0
        %339 = vmatpush2.bf16.msra.mxu0 0
        %340 = vmatprep.subr.bf16.mxu0 0
        %341 = vmatpush2.bf16.msra.mxu0 0
        %342 = vmatprep.subr.bf16.mxu0 0
        %343 = vmatpush2.bf16.msra.mxu0 0
        %344 = vmatprep.subr.bf16.mxu0 0
        %345 = vmatpush2.bf16.msra.mxu0 0
        %346 = vmatprep.subr.bf16.mxu0 0
        %347 = vmatpush2.bf16.msra.mxu0 0
        %348 = vmatprep.subr.bf16.mxu0 0
        %349 = vmatpush2.bf16.msra.mxu0 0
        %350 = vmatprep.subr.bf16.mxu0 0
        %351 = vmatpush2.bf16.msra.mxu0 0
        %352 = vmatprep.mubr.bf16.mxu0 0
        %353 = vmatmul.mubr.bf16.gmra.mxu0 %v318
        %v354 = vpop.f32.mrf.mxu0
        %v355 = vadd.f32 %v303, %v354
        %v356 = vpop.f32.mrf.mxu0
        %v357 = vpop.f32.mrf.mxu0
        %v358 = vpop.f32.mrf.mxu0
        %359 = vdwg.mxu0
        %v360 = vpack.c.bf16 %v355, %v355
        %362 = vrot.lane.b32.xlu0 %v360, 96
        %v363 = vpop.permute.xlu0 %362
        %vm364 = vcmask 130048
        %v366 = vsel %vm364, %v360, 0
        %v369 = vsel %vm364, %v363, 0
        %371 = vmatprep.subr.bf16.mxu0 0
        %372 = vmatpush1.bf16.xpose.msra.mxu0 0
        %373 = vmatprep.subr.bf16.mxu0 0
        %374 = vmatpush1.bf16.xpose.msra.mxu0 0
        %375 = vmatprep.subr.bf16.mxu0 0
        %376 = vmatpush1.bf16.xpose.msra.mxu0 0
        %377 = vmatprep.subr.bf16.mxu0 0
        %378 = vmatpush1.bf16.xpose.msra.mxu0 0
        %379 = vmatprep.subr.bf16.mxu0 0
        %380 = vmatpush1.bf16.xpose.msra.mxu0 0
        %381 = vmatprep.subr.bf16.mxu0 0
        %382 = vmatpush1.bf16.xpose.msra.mxu0 0
        %383 = vmatprep.subr.bf16.mxu0 0
        %384 = vmatpush1.bf16.xpose.msra.mxu0 0
        %385 = vmatprep.subr.bf16.mxu0 0
        %386 = vmatpush1.bf16.xpose.msra.mxu0 %v369
        %387 = vmatprep.subr.bf16.mxu0 0
        %388 = vmatpush2.bf16.xpose.msra.mxu0 0
        %389 = vmatprep.subr.bf16.mxu0 0
        %390 = vmatpush2.bf16.xpose.msra.mxu0 0
        %391 = vmatprep.subr.bf16.mxu0 0
        %392 = vmatpush2.bf16.xpose.msra.mxu0 0
        %393 = vmatprep.subr.bf16.mxu0 0
        %394 = vmatpush2.bf16.xpose.msra.mxu0 0
        %395 = vmatprep.subr.bf16.mxu0 0
        %396 = vmatpush2.bf16.xpose.msra.mxu0 0
        %397 = vmatprep.subr.bf16.mxu0 0
        %398 = vmatpush2.bf16.xpose.msra.mxu0 0
        %399 = vmatprep.subr.bf16.mxu0 0
        %400 = vmatpush2.bf16.xpose.msra.mxu0 0
        %401 = vmatprep.subr.bf16.mxu0 0
        %402 = vmatpush2.bf16.xpose.msra.mxu0 0
        %403 = vmatprep.mubr.bf16.mxu0 0
        %404 = vmatmul.mubr.bf16.gmra.mxu0 %v366
        %v405 = vpop.f32.mrf.mxu0
        %v406 = vadd.f32 0.0, %v405
        %v407 = vpop.f32.mrf.mxu0
        %v408 = vpop.f32.mrf.mxu0
        %v409 = vpop.f32.mrf.mxu0
        %410 = vdwg.mxu0
        %v411 = vmul.f32 %v406, 0.25
        %v413 = vlaneseq
        %v414 = vshrl.u32 %v413, 7
        %v415 = vsub.s32 0, %v414
        %v416 = vrot.slane %v285, %v415
        %v418 = vadd.f32 %v411, %v416
        %vm419 = vcmask 64512
        %v420 = vsel %vm419, %v418, -inf
        %421 = vmax.xlane.f32.xlu0 %v420
        %v422 = vpop.xlane.xlu0 %421
        %v423 = vsub.f32 %v418, %v422
        %v424 = vmul.f32 %v423, 1.442695
        %v425 = vpow.pop %v424
        %v426 = vsel %vm419, %v425, 0.0
        %427 = vadd.xlane.f32.xlu0 %v426
        %v428 = vpop.xlane.xlu0 %427
        %v429 = vrcp.pop %v428
        %v430 = vmul.f32 %v425, %v429
        %v431 = vpack.c.bf16 %v430, %v430
        %432 = vrot.lane.b32.xlu0 %v360, 64
        %v433 = vpop.permute.xlu0 %432
        %v435 = vsel %vm419, %v431, 0
        %vm437 = vcmask 1043456
        %v439 = vsel %vm437, %v433, 0
        %441 = vmatprep.subr.bf16.mxu0 0
        %442 = vmatpush1.bf16.msra.mxu0 0
        %443 = vmatprep.subr.bf16.mxu0 0
        %444 = vmatpush1.bf16.msra.mxu0 0
        %445 = vmatprep.subr.bf16.mxu0 0
        %446 = vmatpush1.bf16.msra.mxu0 0
        %447 = vmatprep.subr.bf16.mxu0 0
        %448 = vmatpush1.bf16.msra.mxu0 0
        %449 = vmatprep.subr.bf16.mxu0 0
        %450 = vmatpush1.bf16.msra.mxu0 0
        %451 = vmatprep.subr.bf16.mxu0 0
        %452 = vmatpush1.bf16.msra.mxu0 0
        %453 = vmatprep.subr.bf16.mxu0 0
        %454 = vmatpush1.bf16.msra.mxu0 0
        %455 = vmatprep.subr.bf16.mxu0 0
        %456 = vmatpush1.bf16.msra.mxu0 %v439
        %457 = vmatprep.subr.bf16.mxu0 0
        %458 = vmatpush2.bf16.msra.mxu0 0
        %459 = vmatprep.subr.bf16.mxu0 0
        %460 = vmatpush2.bf16.msra.mxu0 0
        %461 = vmatprep.subr.bf16.mxu0 0
        %462 = vmatpush2.bf16.msra.mxu0 0
        %463 = vmatprep.subr.bf16.mxu0 0
        %464 = vmatpush2.bf16.msra.mxu0 0
        %465 = vmatprep.subr.bf16.mxu0 0
        %466 = vmatpush2.bf16.msra.mxu0 0
        %467 = vmatprep.subr.bf16.mxu0 0
        %468 = vmatpush2.bf16.msra.mxu0 0
        %469 = vmatprep.subr.bf16.mxu0 0
        %470 = vmatpush2.bf16.msra.mxu0 0
        %471 = vmatprep.subr.bf16.mxu0 0
        %472 = vmatpush2.bf16.msra.mxu0 0
        %473 = vmatprep.mubr.bf16.mxu0 0
        %474 = vmatmul.mubr.bf16.gmra.mxu0 %v435
        %v475 = vpop.f32.mrf.mxu0
        %v476 = vadd.f32 0.0, %v475
        %v477 = vpop.f32.mrf.mxu0
        %v478 = vpop.f32.mrf.mxu0
        %v479 = vpop.f32.mrf.mxu0
        %480 = vdwg.mxu0
        %v481 = vpack.c.bf16 %v476, %v476
        %482 = vrot.lane.b32.xlu0 %v360, 112
        %v483 = vpop.permute.xlu0 %482
        %484 = vrot.lane.b32.xlu0 %v360, 80
        %v485 = vpop.permute.xlu0 %484
        %v487 = vsel %vm364, %v483, 0
        %v490 = vsel %vm364, %v485, 0
        %492 = vmatprep.subr.bf16.mxu0 0
        %493 = vmatpush1.bf16.xpose.msra.mxu0 0
        %494 = vmatprep.subr.bf16.mxu0 0
        %495 = vmatpush1.bf16.xpose.msra.mxu0 0
        %496 = vmatprep.subr.bf16.mxu0 0
        %497 = vmatpush1.bf16.xpose.msra.mxu0 0
        %498 = vmatprep.subr.bf16.mxu0 0
        %499 = vmatpush1.bf16.xpose.msra.mxu0 0
        %500 = vmatprep.subr.bf16.mxu0 0
        %501 = vmatpush1.bf16.xpose.msra.mxu0 0
        %502 = vmatprep.subr.bf16.mxu0 0
        %503 = vmatpush1.bf16.xpose.msra.mxu0 0
        %504 = vmatprep.subr.bf16.mxu0 0
        %505 = vmatpush1.bf16.xpose.msra.mxu0 0
        %506 = vmatprep.subr.bf16.mxu0 0
        %507 = vmatpush1.bf16.xpose.msra.mxu0 %v490
        %508 = vmatprep.subr.bf16.mxu0 0
        %509 = vmatpush2.bf16.xpose.msra.mxu0 0
        %510 = vmatprep.subr.bf16.mxu0 0
        %511 = vmatpush2.bf16.xpose.msra.mxu0 0
        %512 = vmatprep.subr.bf16.mxu0 0
        %513 = vmatpush2.bf16.xpose.msra.mxu0 0
        %514 = vmatprep.subr.bf16.mxu0 0
        %515 = vmatpush2.bf16.xpose.msra.mxu0 0
        %516 = vmatprep.subr.bf16.mxu0 0
        %517 = vmatpush2.bf16.xpose.msra.mxu0 0
        %518 = vmatprep.subr.bf16.mxu0 0
        %519 = vmatpush2.bf16.xpose.msra.mxu0 0
        %520 = vmatprep.subr.bf16.mxu0 0
        %521 = vmatpush2.bf16.xpose.msra.mxu0 0
        %522 = vmatprep.subr.bf16.mxu0 0
        %523 = vmatpush2.bf16.xpose.msra.mxu0 0
        %524 = vmatprep.mubr.bf16.mxu0 0
        %525 = vmatmul.mubr.bf16.gmra.mxu0 %v487
        %v526 = vpop.f32.mrf.mxu0
        %v527 = vadd.f32 0.0, %v526
        %v528 = vpop.f32.mrf.mxu0
        %v529 = vpop.f32.mrf.mxu0
        %v530 = vpop.f32.mrf.mxu0
        %531 = vdwg.mxu0
        %v532 = vmul.f32 %v527, 0.25
        %v533 = vadd.f32 %v532, %v416
        %v534 = vsel %vm419, %v533, -inf
        %535 = vmax.xlane.f32.xlu0 %v534
        %v536 = vpop.xlane.xlu0 %535
        %v537 = vsub.f32 %v533, %v536
        %v538 = vmul.f32 %v537, 1.442695
        %v539 = vpow.pop %v538
        %v540 = vsel %vm419, %v539, 0.0
        %541 = vadd.xlane.f32.xlu0 %v540
        %v542 = vpop.xlane.xlu0 %541
        %v543 = vrcp.pop %v542
        %v544 = vmul.f32 %v539, %v543
        %v545 = vpack.c.bf16 %v544, %v544
        %546 = vrot.lane.b32.xlu0 %v360, 48
        %v547 = vpop.permute.xlu0 %546
        %v549 = vsel %vm419, %v545, 0
        %v552 = vsel %vm437, %v547, 0
        %554 = vmatprep.subr.bf16.mxu0 0
        %555 = vmatpush1.bf16.msra.mxu0 0
        %556 = vmatprep.subr.bf16.mxu0 0
        %557 = vmatpush1.bf16.msra.mxu0 0
        %558 = vmatprep.subr.bf16.mxu0 0
        %559 = vmatpush1.bf16.msra.mxu0 0
        %560 = vmatprep.subr.bf16.mxu0 0
        %561 = vmatpush1.bf16.msra.mxu0 0
        %562 = vmatprep.subr.bf16.mxu0 0
        %563 = vmatpush1.bf16.msra.mxu0 0
        %564 = vmatprep.subr.bf16.mxu0 0
        %565 = vmatpush1.bf16.msra.mxu0 0
        %566 = vmatprep.subr.bf16.mxu0 0
        %567 = vmatpush1.bf16.msra.mxu0 0
        %568 = vmatprep.subr.bf16.mxu0 0
        %569 = vmatpush1.bf16.msra.mxu0 %v552
        %570 = vmatprep.subr.bf16.mxu0 0
        %571 = vmatpush2.bf16.msra.mxu0 0
        %572 = vmatprep.subr.bf16.mxu0 0
        %573 = vmatpush2.bf16.msra.mxu0 0
        %574 = vmatprep.subr.bf16.mxu0 0
        %575 = vmatpush2.bf16.msra.mxu0 0
        %576 = vmatprep.subr.bf16.mxu0 0
        %577 = vmatpush2.bf16.msra.mxu0 0
        %578 = vmatprep.subr.bf16.mxu0 0
        %579 = vmatpush2.bf16.msra.mxu0 0
        %580 = vmatprep.subr.bf16.mxu0 0
        %581 = vmatpush2.bf16.msra.mxu0 0
        %582 = vmatprep.subr.bf16.mxu0 0
        %583 = vmatpush2.bf16.msra.mxu0 0
        %584 = vmatprep.subr.bf16.mxu0 0
        %585 = vmatpush2.bf16.msra.mxu0 0
        %586 = vmatprep.mubr.bf16.mxu0 0
        %587 = vmatmul.mubr.bf16.gmra.mxu0 %v549
        %v588 = vpop.f32.mrf.mxu0
        %v589 = vadd.f32 0.0, %v588
        %v590 = vpop.f32.mrf.mxu0
        %v591 = vpop.f32.mrf.mxu0
        %v592 = vpop.f32.mrf.mxu0
        %593 = vdwg.mxu0
        %v594 = vpack.c.bf16 %v589, %v589
        %v595 = vunpack.c.h.b16 %v290
        %v596 = vunpack.c.h.b16 %v292
        %v597 = vpack.c.b16 %v596, %v595
        %v600 = vsel %vm364, %v594, 0
        %602 = vmatprep.subr.bf16.mxu0 0
        %603 = vmatpush1.bf16.msra.mxu0 0
        %604 = vmatprep.subr.bf16.mxu0 0
        %605 = vmatpush1.bf16.msra.mxu0 0
        %606 = vmatprep.subr.bf16.mxu0 0
        %607 = vmatpush1.bf16.msra.mxu0 0
        %608 = vmatprep.subr.bf16.mxu0 0
        %609 = vmatpush1.bf16.msra.mxu0 0
        %610 = vmatprep.subr.bf16.mxu0 0
        %611 = vmatpush1.bf16.msra.mxu0 0
        %612 = vmatprep.subr.bf16.mxu0 0
        %613 = vmatpush1.bf16.msra.mxu0 0
        %614 = vmatprep.subr.bf16.mxu0 0
        %615 = vmatpush1.bf16.msra.mxu0 0
        %616 = vmatprep.subr.bf16.mxu0 0
        %617 = vmatpush1.bf16.msra.mxu0 %v597
        %618 = vmatprep.subr.bf16.mxu0 0
        %619 = vmatpush2.bf16.msra.mxu0 0
        %620 = vmatprep.subr.bf16.mxu0 0
        %621 = vmatpush2.bf16.msra.mxu0 0
        %622 = vmatprep.subr.bf16.mxu0 0
        %623 = vmatpush2.bf16.msra.mxu0 0
        %624 = vmatprep.subr.bf16.mxu0 0
        %625 = vmatpush2.bf16.msra.mxu0 0
        %626 = vmatprep.subr.bf16.mxu0 0
        %627 = vmatpush2.bf16.msra.mxu0 0
        %628 = vmatprep.subr.bf16.mxu0 0
        %629 = vmatpush2.bf16.msra.mxu0 0
        %630 = vmatprep.subr.bf16.mxu0 0
        %631 = vmatpush2.bf16.msra.mxu0 0
        %632 = vmatprep.subr.bf16.mxu0 0
        %633 = vmatpush2.bf16.msra.mxu0 0
        %634 = vmatprep.mubr.bf16.mxu0 0
        %635 = vmatmul.mubr.bf16.gmra.mxu0 %v600
        %v636 = vpop.f32.mrf.mxu0
        %v637 = vadd.f32 0.0, %v636
        %v638 = vpop.f32.mrf.mxu0
        %v639 = vpop.f32.mrf.mxu0
        %v640 = vpop.f32.mrf.mxu0
        %641 = vdwg.mxu0
        %v642 = vunpack.c.h.b16 %v286
        %v643 = vunpack.c.h.b16 %v288
        %v644 = vpack.c.b16 %v643, %v642
        %v647 = vsel %vm364, %v481, 0
        %649 = vmatprep.subr.bf16.mxu0 0
        %650 = vmatpush1.bf16.msra.mxu0 0
        %651 = vmatprep.subr.bf16.mxu0 0
        %652 = vmatpush1.bf16.msra.mxu0 0
        %653 = vmatprep.subr.bf16.mxu0 0
        %654 = vmatpush1.bf16.msra.mxu0 0
        %655 = vmatprep.subr.bf16.mxu0 0
        %656 = vmatpush1.bf16.msra.mxu0 0
        %657 = vmatprep.subr.bf16.mxu0 0
        %658 = vmatpush1.bf16.msra.mxu0 0
        %659 = vmatprep.subr.bf16.mxu0 0
        %660 = vmatpush1.bf16.msra.mxu0 0
        %661 = vmatprep.subr.bf16.mxu0 0
        %662 = vmatpush1.bf16.msra.mxu0 0
        %663 = vmatprep.subr.bf16.mxu0 0
        %664 = vmatpush1.bf16.msra.mxu0 %v644
        %665 = vmatprep.subr.bf16.mxu0 0
        %666 = vmatpush2.bf16.msra.mxu0 0
        %667 = vmatprep.subr.bf16.mxu0 0
        %668 = vmatpush2.bf16.msra.mxu0 0
        %669 = vmatprep.subr.bf16.mxu0 0
        %670 = vmatpush2.bf16.msra.mxu0 0
        %671 = vmatprep.subr.bf16.mxu0 0
        %672 = vmatpush2.bf16.msra.mxu0 0
        %673 = vmatprep.subr.bf16.mxu0 0
        %674 = vmatpush2.bf16.msra.mxu0 0
        %675 = vmatprep.subr.bf16.mxu0 0
        %676 = vmatpush2.bf16.msra.mxu0 0
        %677 = vmatprep.subr.bf16.mxu0 0
        %678 = vmatpush2.bf16.msra.mxu0 0
        %679 = vmatprep.subr.bf16.mxu0 0
        %680 = vmatpush2.bf16.msra.mxu0 0
        %681 = vmatprep.mubr.bf16.mxu0 0
        %682 = vmatmul.mubr.bf16.gmra.mxu0 %v647
        %v683 = vpop.f32.mrf.mxu0
        %v684 = vadd.f32 %v637, %v683
        %v685 = vpop.f32.mrf.mxu0
        %v686 = vpop.f32.mrf.mxu0
        %v687 = vpop.f32.mrf.mxu0
        %688 = vdwg.mxu0
        %v689 = vlaneseq
        %v690 = vshrl.u32 %v689, 7
        %v691 = vsub.s32 1, %v690
        %v692 = vrot.slane %v298, %v691
        %v693 = vadd.f32 %v684, %v692
        %v694 = vadd.f32 %v281, %v693
        %v695 = vsel %vm316, %v694, 0.0
        %696 = vadd.xlane.f32.xlu0 %v695
        %v697 = vpop.xlane.xlu0 %696
        %v698 = vrcp.pop 32.0
        %v699 = vmul.f32 %v697, %v698
        %v700 = vsub.f32 %v694, %v699
        %v701 = vmul.f32 %v700, %v700
        %v702 = vsel %vm316, %v701, 0.0
        %703 = vadd.xlane.f32.xlu0 %v702
        %v704 = vpop.xlane.xlu0 %703
        %v705 = vmul.f32 %v704, %v698
        %v706 = vadd.f32 %v705, 1e-12
        %v707 = vrsqrt.pop %v706
        %v708 = vmul.f32 %v700, %v707
        %v709 = vlaneseq
        %v710 = vshrl.u32 %v709, 7
        %v711 = vsub.s32 2, %v710
        %v712 = vrot.slane %v298, %v711
        %v713 = vmul.f32 %v708, %v712
        %v714 = vlaneseq
        %v715 = vshrl.u32 %v714, 7
        %v716 = vsub.s32 3, %v715
        %v717 = vrot.slane %v298, %v716
        %v718 = vadd.f32 %v713, %v717
        %v719 = vpack.c.bf16 %v718, %v718
        %v720 = vlaneseq
        %v721 = vshrl.u32 %v720, 7
        %v722 = vsub.s32 4, %v721
        %v723 = vrot.slane %v298, %v722
        %v728 = vunpack.c.l.b16 %v287
        %v729 = vunpack.c.l.b16 %v289
        %v730 = vunpack.c.l.b16 %v291
        %v731 = vunpack.c.l.b16 %v293
        %v732 = vpack.c.b16 %v729, %v728
        %v733 = vpack.c.b16 %v731, %v730
        %v737 = vsel %vm316, %v719, 0
        %739 = vmatprep.subr.bf16.mxu0 0
        %740 = vmatpush1.bf16.msra.mxu0 0
        %741 = vmatprep.subr.bf16.mxu0 0
        %742 = vmatpush1.bf16.msra.mxu0 0
        %743 = vmatprep.subr.bf16.mxu0 0
        %744 = vmatpush1.bf16.msra.mxu0 0
        %745 = vmatprep.subr.bf16.mxu0 0
        %746 = vmatpush1.bf16.msra.mxu0 0
        %747 = vmatprep.subr.bf16.mxu0 0
        %748 = vmatpush1.bf16.msra.mxu0 0
        %749 = vmatprep.subr.bf16.mxu0 0
        %750 = vmatpush1.bf16.msra.mxu0 0
        %751 = vmatprep.subr.bf16.mxu0 0
        %752 = vmatpush1.bf16.msra.mxu0 %v733
        %753 = vmatprep.subr.bf16.mxu0 0
        %754 = vmatpush1.bf16.msra.mxu0 %v732
        %755 = vmatprep.subr.bf16.mxu0 0
        %756 = vmatpush2.bf16.msra.mxu0 0
        %757 = vmatprep.subr.bf16.mxu0 0
        %758 = vmatpush2.bf16.msra.mxu0 0
        %759 = vmatprep.subr.bf16.mxu0 0
        %760 = vmatpush2.bf16.msra.mxu0 0
        %761 = vmatprep.subr.bf16.mxu0 0
        %762 = vmatpush2.bf16.msra.mxu0 0
        %763 = vmatprep.subr.bf16.mxu0 0
        %764 = vmatpush2.bf16.msra.mxu0 0
        %765 = vmatprep.subr.bf16.mxu0 0
        %766 = vmatpush2.bf16.msra.mxu0 0
        %767 = vmatprep.subr.bf16.mxu0 0
        %768 = vmatpush2.bf16.msra.mxu0 0
        %769 = vmatprep.subr.bf16.mxu0 0
        %770 = vmatpush2.bf16.msra.mxu0 0
        %771 = vmatprep.mubr.bf16.mxu0 0
        %772 = vmatmul.mubr.bf16.gmra.mxu0 %v737
        %v773 = vpop.f32.mrf.mxu0
        %v774 = vadd.f32 %v723, %v773
        %v775 = vpop.f32.mrf.mxu0
        %v776 = vpop.f32.mrf.mxu0
        %v777 = vpop.f32.mrf.mxu0
        %778 = vdwg.mxu0
        %v779 = vmul.f32 %v774, %v774
        %v780 = vmul.f32 %v774, %v779
        %v781 = vmul.f32 %v780, 0.044715
        %v782 = vadd.f32 %v774, %v781
        %v783 = vmul.f32 %v782, 0.7978846
        %v784 = vtanh.pop %v783
        %v785 = vadd.f32 %v784, 1.0
        %v786 = vmul.f32 %v785, 0.5
        %v787 = vmul.f32 %v774, %v786
        %v788 = vpack.c.bf16 %v787, %v787
        %v789 = vlaneseq
        %v790 = vshrl.u32 %v789, 7
        %v791 = vsub.s32 5, %v790
        %v792 = vrot.slane %v298, %v791
        %v797 = vunpack.c.h.b16 %v287
        %v798 = vunpack.c.h.b16 %v289
        %v799 = vunpack.c.h.b16 %v291
        %v800 = vunpack.c.h.b16 %v293
        %v801 = vunpack.c.h.b16 %v294
        %v802 = vunpack.c.h.b16 %v295
        %v803 = vunpack.c.h.b16 %v296
        %v804 = vunpack.c.h.b16 %v297
        %v805 = vpack.c.b16 %v798, %v797
        %v806 = vpack.c.b16 %v800, %v799
        %v807 = vpack.c.b16 %v802, %v801
        %v808 = vpack.c.b16 %v804, %v803
        %vm813 = vcmask 523264
        %v815 = vsel %vm813, %v788, 0
        %817 = vmatprep.subr.bf16.mxu0 0
        %818 = vmatpush1.bf16.msra.mxu0 0
        %819 = vmatprep.subr.bf16.mxu0 0
        %820 = vmatpush1.bf16.msra.mxu0 0
        %821 = vmatprep.subr.bf16.mxu0 0
        %822 = vmatpush1.bf16.msra.mxu0 0
        %823 = vmatprep.subr.bf16.mxu0 0
        %824 = vmatpush1.bf16.msra.mxu0 0
        %825 = vmatprep.subr.bf16.mxu0 0
        %826 = vmatpush1.bf16.msra.mxu0 %v808
        %827 = vmatprep.subr.bf16.mxu0 0
        %828 = vmatpush1.bf16.msra.mxu0 %v807
        %829 = vmatprep.subr.bf16.mxu0 0
        %830 = vmatpush1.bf16.msra.mxu0 %v806
        %831 = vmatprep.subr.bf16.mxu0 0
        %832 = vmatpush1.bf16.msra.mxu0 %v805
        %833 = vmatprep.subr.bf16.mxu0 0
        %834 = vmatpush2.bf16.msra.mxu0 0
        %835 = vmatprep.subr.bf16.mxu0 0
        %836 = vmatpush2.bf16.msra.mxu0 0
        %837 = vmatprep.subr.bf16.mxu0 0
        %838 = vmatpush2.bf16.msra.mxu0 0
        %839 = vmatprep.subr.bf16.mxu0 0
        %840 = vmatpush2.bf16.msra.mxu0 0
        %841 = vmatprep.subr.bf16.mxu0 0
        %842 = vmatpush2.bf16.msra.mxu0 0
        %843 = vmatprep.subr.bf16.mxu0 0
        %844 = vmatpush2.bf16.msra.mxu0 0
        %845 = vmatprep.subr.bf16.mxu0 0
        %846 = vmatpush2.bf16.msra.mxu0 0
        %847 = vmatprep.subr.bf16.mxu0 0
        %848 = vmatpush2.bf16.msra.mxu0 0
        %849 = vmatprep.mubr.bf16.mxu0 0
        %850 = vmatmul.mubr.bf16.gmra.mxu0 %v815
        %v851 = vpop.f32.mrf.mxu0
        %v852 = vadd.f32 %v792, %v851
        %v853 = vpop.f32.mrf.mxu0
        %v854 = vpop.f32.mrf.mxu0
        %v855 = vpop.f32.mrf.mxu0
        %856 = vdwg.mxu0
        %v857 = vadd.f32 %v718, %v852
        %v858 = vsel %vm316, %v857, 0.0
        %859 = vadd.xlane.f32.xlu0 %v858
        %v860 = vpop.xlane.xlu0 %859
        %v861 = vmul.f32 %v860, %v698
        %v862 = vsub.f32 %v857, %v861
        %v863 = vmul.f32 %v862, %v862
        %v864 = vsel %vm316, %v863, 0.0
        %865 = vadd.xlane.f32.xlu0 %v864
        %v866 = vpop.xlane.xlu0 %865
        %v867 = vmul.f32 %v866, %v698
        %v868 = vadd.f32 %v867, 1e-12
        %v869 = vrsqrt.pop %v868
        %v870 = vmul.f32 %v862, %v869
        %v871 = vlaneseq
        %v872 = vshrl.u32 %v871, 7
        %v873 = vsub.s32 6, %v872
        %v874 = vrot.slane %v298, %v873
        %v875 = vmul.f32 %v870, %v874
        %v876 = vlaneseq
        %v877 = vshrl.u32 %v876, 7
        %v878 = vsub.s32 7, %v877
        %v879 = vrot.slane %v298, %v878
        %v880 = vadd.f32 %v875, %v879
        %s881 = scalar_lea.vmem [#allocation2], 128
        %v882 = vld [vmem:[%s881] sm:$0xff]
        %v883 = vld [vmem:[%s881 + $0x8] sm:$0xff]
        %v884 = vld [vmem:[%s881 + $0x10] sm:$0xff]
        %v885 = vld [vmem:[%s881 + $0x18] sm:$0xff]
        %v886 = vld [vmem:[%s881 + $0x20] sm:$0xff]
        %v887 = vld [vmem:[%s881 + $0x28] sm:$0xff]
        %v888 = vld [vmem:[%s881 + $0x30] sm:$0xff]
        %v889 = vld [vmem:[%s881 + $0x38] sm:$0xff]
        %v890 = vld [vmem:[%s881 + $0x48] sm:$0xff]
        %v891 = vld [vmem:[%s881 + $0x58] sm:$0xff]
        %v892 = vld [vmem:[%s881 + $0x68] sm:$0xff]
        %v893 = vld [vmem:[%s881 + $0x78] sm:$0xff]
        %s894 = scalar_lea.vmem [#allocation5], 8
        %v895 = vld [vmem:[%s894] sm:$0xff]
        %v896 = vpack.c.bf16 %v880, %v880
        %v897 = vlaneseq
        %v898 = vshrl.u32 %v897, 7
        %v899 = vsub.s32 0, %v898
        %v900 = vrot.slane %v895, %v899
        %v905 = vunpack.c.l.b16 %v882
        %v906 = vunpack.c.l.b16 %v884
        %v907 = vunpack.c.l.b16 %v886
        %v908 = vunpack.c.l.b16 %v888
        %v909 = vpack.c.b16 %v906, %v905
        %v910 = vpack.c.b16 %v908, %v907
        %v914 = vsel %vm316, %v896, 0
        %916 = vmatprep.subr.bf16.mxu0 0
        %917 = vmatpush1.bf16.msra.mxu0 0
        %918 = vmatprep.subr.bf16.mxu0 0
        %919 = vmatpush1.bf16.msra.mxu0 0
        %920 = vmatprep.subr.bf16.mxu0 0
        %921 = vmatpush1.bf16.msra.mxu0 0
        %922 = vmatprep.subr.bf16.mxu0 0
        %923 = vmatpush1.bf16.msra.mxu0 0
        %924 = vmatprep.subr.bf16.mxu0 0
        %925 = vmatpush1.bf16.msra.mxu0 0
        %926 = vmatprep.subr.bf16.mxu0 0
        %927 = vmatpush1.bf16.msra.mxu0 0
        %928 = vmatprep.subr.bf16.mxu0 0
        %929 = vmatpush1.bf16.msra.mxu0 %v910
        %930 = vmatprep.subr.bf16.mxu0 0
        %931 = vmatpush1.bf16.msra.mxu0 %v909
        %932 = vmatprep.subr.bf16.mxu0 0
        %933 = vmatpush2.bf16.msra.mxu0 0
        %934 = vmatprep.subr.bf16.mxu0 0
        %935 = vmatpush2.bf16.msra.mxu0 0
        %936 = vmatprep.subr.bf16.mxu0 0
        %937 = vmatpush2.bf16.msra.mxu0 0
        %938 = vmatprep.subr.bf16.mxu0 0
        %939 = vmatpush2.bf16.msra.mxu0 0
        %940 = vmatprep.subr.bf16.mxu0 0
        %941 = vmatpush2.bf16.msra.mxu0 0
        %942 = vmatprep.subr.bf16.mxu0 0
        %943 = vmatpush2.bf16.msra.mxu0 0
        %944 = vmatprep.subr.bf16.mxu0 0
        %945 = vmatpush2.bf16.msra.mxu0 0
        %946 = vmatprep.subr.bf16.mxu0 0
        %947 = vmatpush2.bf16.msra.mxu0 0
        %948 = vmatprep.mubr.bf16.mxu0 0
        %949 = vmatmul.mubr.bf16.gmra.mxu0 %v914
        %v950 = vpop.f32.mrf.mxu0
        %v951 = vadd.f32 %v900, %v950
        %v952 = vpop.f32.mrf.mxu0
        %v953 = vpop.f32.mrf.mxu0
        %v954 = vpop.f32.mrf.mxu0
        %955 = vdwg.mxu0
        %v956 = vpack.c.bf16 %v951, %v951
        %958 = vrot.lane.b32.xlu0 %v956, 96
        %v959 = vpop.permute.xlu0 %958
        %v961 = vsel %vm364, %v956, 0
        %v964 = vsel %vm364, %v959, 0
        %966 = vmatprep.subr.bf16.mxu0 0
        %967 = vmatpush1.bf16.xpose.msra.mxu0 0
        %968 = vmatprep.subr.bf16.mxu0 0
        %969 = vmatpush1.bf16.xpose.msra.mxu0 0
        %970 = vmatprep.subr.bf16.mxu0 0
        %971 = vmatpush1.bf16.xpose.msra.mxu0 0
        %972 = vmatprep.subr.bf16.mxu0 0
        %973 = vmatpush1.bf16.xpose.msra.mxu0 0
        %974 = vmatprep.subr.bf16.mxu0 0
        %975 = vmatpush1.bf16.xpose.msra.mxu0 0
        %976 = vmatprep.subr.bf16.mxu0 0
        %977 = vmatpush1.bf16.xpose.msra.mxu0 0
        %978 = vmatprep.subr.bf16.mxu0 0
        %979 = vmatpush1.bf16.xpose.msra.mxu0 0
        %980 = vmatprep.subr.bf16.mxu0 0
        %981 = vmatpush1.bf16.xpose.msra.mxu0 %v964
        %982 = vmatprep.subr.bf16.mxu0 0
        %983 = vmatpush2.bf16.xpose.msra.mxu0 0
        %984 = vmatprep.subr.bf16.mxu0 0
        %985 = vmatpush2.bf16.xpose.msra.mxu0 0
        %986 = vmatprep.subr.bf16.mxu0 0
        %987 = vmatpush2.bf16.xpose.msra.mxu0 0
        %988 = vmatprep.subr.bf16.mxu0 0
        %989 = vmatpush2.bf16.xpose.msra.mxu0 0
        %990 = vmatprep.subr.bf16.mxu0 0
        %991 = vmatpush2.bf16.xpose.msra.mxu0 0
        %992 = vmatprep.subr.bf16.mxu0 0
        %993 = vmatpush2.bf16.xpose.msra.mxu0 0
        %994 = vmatprep.subr.bf16.mxu0 0
        %995 = vmatpush2.bf16.xpose.msra.mxu0 0
        %996 = vmatprep.subr.bf16.mxu0 0
        %997 = vmatpush2.bf16.xpose.msra.mxu0 0
        %998 = vmatprep.mubr.bf16.mxu0 0
        %999 = vmatmul.mubr.bf16.gmra.mxu0 %v961
        %v1000 = vpop.f32.mrf.mxu0
        %v1001 = vadd.f32 0.0, %v1000
        %v1002 = vpop.f32.mrf.mxu0
        %v1003 = vpop.f32.mrf.mxu0
        %v1004 = vpop.f32.mrf.mxu0
        %1005 = vdwg.mxu0
        %v1006 = vmul.f32 %v1001, 0.25
        %v1007 = vadd.f32 %v1006, %v416
        %v1008 = vsel %vm419, %v1007, -inf
        %1009 = vmax.xlane.f32.xlu0 %v1008
        %v1010 = vpop.xlane.xlu0 %1009
        %v1011 = vsub.f32 %v1007, %v1010
        %v1012 = vmul.f32 %v1011, 1.442695
        %v1013 = vpow.pop %v1012
        %v1014 = vsel %vm419, %v1013, 0.0
        %1015 = vadd.xlane.f32.xlu0 %v1014
        %v1016 = vpop.xlane.xlu0 %1015
        %v1017 = vrcp.pop %v1016
        %v1018 = vmul.f32 %v1013, %v1017
        %v1019 = vpack.c.bf16 %v1018, %v1018
        %1020 = vrot.lane.b32.xlu0 %v956, 64
        %v1021 = vpop.permute.xlu0 %1020
        %v1023 = vsel %vm419, %v1019, 0
        %v1026 = vsel %vm437, %v1021, 0
        %1028 = vmatprep.subr.bf16.mxu0 0
        %1029 = vmatpush1.bf16.msra.mxu0 0
        %1030 = vmatprep.subr.bf16.mxu0 0
        %1031 = vmatpush1.bf16.msra.mxu0 0
        %1032 = vmatprep.subr.bf16.mxu0 0
        %1033 = vmatpush1.bf16.msra.mxu0 0
        %1034 = vmatprep.subr.bf16.mxu0 0
        %1035 = vmatpush1.bf16.msra.mxu0 0
        %1036 = vmatprep.subr.bf16.mxu0 0
        %1037 = vmatpush1.bf16.msra.mxu0 0
        %1038 = vmatprep.subr.bf16.mxu0 0
        %1039 = vmatpush1.bf16.msra.mxu0 0
        %1040 = vmatprep.subr.bf16.mxu0 0
        %1041 = vmatpush1.bf16.msra.mxu0 0
        %1042 = vmatprep.subr.bf16.mxu0 0
        %1043 = vmatpush1.bf16.msra.mxu0 %v1026
        %1044 = vmatprep.subr.bf16.mxu0 0
        %1045 = vmatpush2.bf16.msra.mxu0 0
        %1046 = vmatprep.subr.bf16.mxu0 0
        %1047 = vmatpush2.bf16.msra.mxu0 0
        %1048 = vmatprep.subr.bf16.mxu0 0
        %1049 = vmatpush2.bf16.msra.mxu0 0
        %1050 = vmatprep.subr.bf16.mxu0 0
        %1051 = vmatpush2.bf16.msra.mxu0 0
        %1052 = vmatprep.subr.bf16.mxu0 0
        %1053 = vmatpush2.bf16.msra.mxu0 0
        %1054 = vmatprep.subr.bf16.mxu0 0
        %1055 = vmatpush2.bf16.msra.mxu0 0
        %1056 = vmatprep.subr.bf16.mxu0 0
        %1057 = vmatpush2.bf16.msra.mxu0 0
        %1058 = vmatprep.subr.bf16.mxu0 0
        %1059 = vmatpush2.bf16.msra.mxu0 0
        %1060 = vmatprep.mubr.bf16.mxu0 0
        %1061 = vmatmul.mubr.bf16.gmra.mxu0 %v1023
        %v1062 = vpop.f32.mrf.mxu0
        %v1063 = vadd.f32 0.0, %v1062
        %v1064 = vpop.f32.mrf.mxu0
        %v1065 = vpop.f32.mrf.mxu0
        %v1066 = vpop.f32.mrf.mxu0
        %1067 = vdwg.mxu0
        %v1068 = vpack.c.bf16 %v1063, %v1063
        %1069 = vrot.lane.b32.xlu0 %v956, 112
        %v1070 = vpop.permute.xlu0 %1069
        %1071 = vrot.lane.b32.xlu0 %v956, 80
        %v1072 = vpop.permute.xlu0 %1071
        %v1074 = vsel %vm364, %v1070, 0
        %v1077 = vsel %vm364, %v1072, 0
        %1079 = vmatprep.subr.bf16.mxu0 0
        %1080 = vmatpush1.bf16.xpose.msra.mxu0 0
        %1081 = vmatprep.subr.bf16.mxu0 0
        %1082 = vmatpush1.bf16.xpose.msra.mxu0 0
        %1083 = vmatprep.subr.bf16.mxu0 0
        %1084 = vmatpush1.bf16.xpose.msra.mxu0 0
        %1085 = vmatprep.subr.bf16.mxu0 0
        %1086 = vmatpush1.bf16.xpose.msra.mxu0 0
        %1087 = vmatprep.subr.bf16.mxu0 0
        %1088 = vmatpush1.bf16.xpose.msra.mxu0 0
        %1089 = vmatprep.subr.bf16.mxu0 0
        %1090 = vmatpush1.bf16.xpose.msra.mxu0 0
        %1091 = vmatprep.subr.bf16.mxu0 0
        %1092 = vmatpush1.bf16.xpose.msra.mxu0 0
        %1093 = vmatprep.subr.bf16.mxu0 0
        %1094 = vmatpush1.bf16.xpose.msra.mxu0 %v1077
        %1095 = vmatprep.subr.bf16.mxu0 0
        %1096 = vmatpush2.bf16.xpose.msra.mxu0 0
        %1097 = vmatprep.subr.bf16.mxu0 0
        %1098 = vmatpush2.bf16.xpose.msra.mxu0 0
        %1099 = vmatprep.subr.bf16.mxu0 0
        %1100 = vmatpush2.bf16.xpose.msra.mxu0 0
        %1101 = vmatprep.subr.bf16.mxu0 0
        %1102 = vmatpush2.bf16.xpose.msra.mxu0 0
        %1103 = vmatprep.subr.bf16.mxu0 0
        %1104 = vmatpush2.bf16.xpose.msra.mxu0 0
        %1105 = vmatprep.subr.bf16.mxu0 0
        %1106 = vmatpush2.bf16.xpose.msra.mxu0 0
        %1107 = vmatprep.subr.bf16.mxu0 0
        %1108 = vmatpush2.bf16.xpose.msra.mxu0 0
        %1109 = vmatprep.subr.bf16.mxu0 0
        %1110 = vmatpush2.bf16.xpose.msra.mxu0 0
        %1111 = vmatprep.mubr.bf16.mxu0 0
        %1112 = vmatmul.mubr.bf16.gmra.mxu0 %v1074
        %v1113 = vpop.f32.mrf.mxu0
        %v1114 = vadd.f32 0.0, %v1113
        %v1115 = vpop.f32.mrf.mxu0
        %v1116 = vpop.f32.mrf.mxu0
        %v1117 = vpop.f32.mrf.mxu0
        %1118 = vdwg.mxu0
        %v1119 = vmul.f32 %v1114, 0.25
        %v1120 = vadd.f32 %v1119, %v416
        %v1121 = vsel %vm419, %v1120, -inf
        %1122 = vmax.xlane.f32.xlu0 %v1121
        %v1123 = vpop.xlane.xlu0 %1122
        %v1124 = vsub.f32 %v1120, %v1123
        %v1125 = vmul.f32 %v1124, 1.442695
        %v1126 = vpow.pop %v1125
        %v1127 = vsel %vm419, %v1126, 0.0
        %1128 = vadd.xlane.f32.xlu0 %v1127
        %v1129 = vpop.xlane.xlu0 %1128
        %v1130 = vrcp.pop %v1129
        %v1131 = vmul.f32 %v1126, %v1130
        %v1132 = vpack.c.bf16 %v1131, %v1131
        %1133 = vrot.lane.b32.xlu0 %v956, 48
        %v1134 = vpop.permute.xlu0 %1133
        %v1136 = vsel %vm419, %v1132, 0
        %v1139 = vsel %vm437, %v1134, 0
        %1141 = vmatprep.subr.bf16.mxu0 0
        %1142 = vmatpush1.bf16.msra.mxu0 0
        %1143 = vmatprep.subr.bf16.mxu0 0
        %1144 = vmatpush1.bf16.msra.mxu0 0
        %1145 = vmatprep.subr.bf16.mxu0 0
        %1146 = vmatpush1.bf16.msra.mxu0 0
        %1147 = vmatprep.subr.bf16.mxu0 0
        %1148 = vmatpush1.bf16.msra.mxu0 0
        %1149 = vmatprep.subr.bf16.mxu0 0
        %1150 = vmatpush1.bf16.msra.mxu0 0
        %1151 = vmatprep.subr.bf16.mxu0 0
        %1152 = vmatpush1.bf16.msra.mxu0 0
        %1153 = vmatprep.subr.bf16.mxu0 0
        %1154 = vmatpush1.bf16.msra.mxu0 0
        %1155 = vmatprep.subr.bf16.mxu0 0
        %1156 = vmatpush1.bf16.msra.mxu0 %v1139
        %1157 = vmatprep.subr.bf16.mxu0 0
        %1158 = vmatpush2.bf16.msra.mxu0 0
        %1159 = vmatprep.subr.bf16.mxu0 0
        %1160 = vmatpush2.bf16.msra.mxu0 0
        %1161 = vmatprep.subr.bf16.mxu0 0
        %1162 = vmatpush2.bf16.msra.mxu0 0
        %1163 = vmatprep.subr.bf16.mxu0 0
        %1164 = vmatpush2.bf16.msra.mxu0 0
        %1165 = vmatprep.subr.bf16.mxu0 0
        %1166 = vmatpush2.bf16.msra.mxu0 0
        %1167 = vmatprep.subr.bf16.mxu0 0
        %1168 = vmatpush2.bf16.msra.mxu0 0
        %1169 = vmatprep.subr.bf16.mxu0 0
        %1170 = vmatpush2.bf16.msra.mxu0 0
        %1171 = vmatprep.subr.bf16.mxu0 0
        %1172 = vmatpush2.bf16.msra.mxu0 0
        %1173 = vmatprep.mubr.bf16.mxu0 0
        %1174 = vmatmul.mubr.bf16.gmra.mxu0 %v1136
        %v1175 = vpop.f32.mrf.mxu0
        %v1176 = vadd.f32 0.0, %v1175
        %v1177 = vpop.f32.mrf.mxu0
        %v1178 = vpop.f32.mrf.mxu0
        %v1179 = vpop.f32.mrf.mxu0
        %1180 = vdwg.mxu0
        %v1181 = vpack.c.bf16 %v1176, %v1176
        %v1182 = vunpack.c.h.b16 %v886
        %v1183 = vunpack.c.h.b16 %v888
        %v1184 = vpack.c.b16 %v1183, %v1182
        %v1187 = vsel %vm364, %v1181, 0
        %1189 = vmatprep.subr.bf16.mxu0 0
        %1190 = vmatpush1.bf16.msra.mxu0 0
        %1191 = vmatprep.subr.bf16.mxu0 0
        %1192 = vmatpush1.bf16.msra.mxu0 0
        %1193 = vmatprep.subr.bf16.mxu0 0
        %1194 = vmatpush1.bf16.msra.mxu0 0
        %1195 = vmatprep.subr.bf16.mxu0 0
        %1196 = vmatpush1.bf16.msra.mxu0 0
        %1197 = vmatprep.subr.bf16.mxu0 0
        %1198 = vmatpush1.bf16.msra.mxu0 0
        %1199 = vmatprep.subr.bf16.mxu0 0
        %1200 = vmatpush1.bf16.msra.mxu0 0
        %1201 = vmatprep.subr.bf16.mxu0 0
        %1202 = vmatpush1.bf16.msra.mxu0 0
        %1203 = vmatprep.subr.bf16.mxu0 0
        %1204 = vmatpush1.bf16.msra.mxu0 %v1184
        %1205 = vmatprep.subr.bf16.mxu0 0
        %1206 = vmatpush2.bf16.msra.mxu0 0
        %1207 = vmatprep.subr.bf16.mxu0 0
        %1208 = vmatpush2.bf16.msra.mxu0 0
        %1209 = vmatprep.subr.bf16.mxu0 0
        %1210 = vmatpush2.bf16.msra.mxu0 0
        %1211 = vmatprep.subr.bf16.mxu0 0
        %1212 = vmatpush2.bf16.msra.mxu0 0
        %1213 = vmatprep.subr.bf16.mxu0 0
        %1214 = vmatpush2.bf16.msra.mxu0 0
        %1215 = vmatprep.subr.bf16.mxu0 0
        %1216 = vmatpush2.bf16.msra.mxu0 0
        %1217 = vmatprep.subr.bf16.mxu0 0
        %1218 = vmatpush2.bf16.msra.mxu0 0
        %1219 = vmatprep.subr.bf16.mxu0 0
        %1220 = vmatpush2.bf16.msra.mxu0 0
        %1221 = vmatprep.mubr.bf16.mxu0 0
        %1222 = vmatmul.mubr.bf16.gmra.mxu0 %v1187
        %v1223 = vpop.f32.mrf.mxu0
        %v1224 = vadd.f32 0.0, %v1223
        %v1225 = vpop.f32.mrf.mxu0
        %v1226 = vpop.f32.mrf.mxu0
        %v1227 = vpop.f32.mrf.mxu0
        %1228 = vdwg.mxu0
        %v1229 = vunpack.c.h.b16 %v882
        %v1230 = vunpack.c.h.b16 %v884
        %v1231 = vpack.c.b16 %v1230, %v1229
        %v1234 = vsel %vm364, %v1068, 0
        %1236 = vmatprep.subr.bf16.mxu0 0
        %1237 = vmatpush1.bf16.msra.mxu0 0
        %1238 = vmatprep.subr.bf16.mxu0 0
        %1239 = vmatpush1.bf16.msra.mxu0 0
        %1240 = vmatprep.subr.bf16.mxu0 0
        %1241 = vmatpush1.bf16.msra.mxu0 0
        %1242 = vmatprep.subr.bf16.mxu0 0
        %1243 = vmatpush1.bf16.msra.mxu0 0
        %1244 = vmatprep.subr.bf16.mxu0 0
        %1245 = vmatpush1.bf16.msra.mxu0 0
        %1246 = vmatprep.subr.bf16.mxu0 0
        %1247 = vmatpush1.bf16.msra.mxu0 0
        %1248 = vmatprep.subr.bf16.mxu0 0
        %1249 = vmatpush1.bf16.msra.mxu0 0
        %1250 = vmatprep.subr.bf16.mxu0 0
        %1251 = vmatpush1.bf16.msra.mxu0 %v1231
        %1252 = vmatprep.subr.bf16.mxu0 0
        %1253 = vmatpush2.bf16.msra.mxu0 0
        %1254 = vmatprep.subr.bf16.mxu0 0
        %1255 = vmatpush2.bf16.msra.mxu0 0
        %1256 = vmatprep.subr.bf16.mxu0 0
        %1257 = vmatpush2.bf16.msra.mxu0 0
        %1258 = vmatprep.subr.bf16.mxu0 0
        %1259 = vmatpush2.bf16.msra.mxu0 0
        %1260 = vmatprep.subr.bf16.mxu0 0
        %1261 = vmatpush2.bf16.msra.mxu0 0
        %1262 = vmatprep.subr.bf16.mxu0 0
        %1263 = vmatpush2.bf16.msra.mxu0 0
        %1264 = vmatprep.subr.bf16.mxu0 0
        %1265 = vmatpush2.bf16.msra.mxu0 0
        %1266 = vmatprep.subr.bf16.mxu0 0
        %1267 = vmatpush2.bf16.msra.mxu0 0
        %1268 = vmatprep.mubr.bf16.mxu0 0
        %1269 = vmatmul.mubr.bf16.gmra.mxu0 %v1234
        %v1270 = vpop.f32.mrf.mxu0
        %v1271 = vadd.f32 %v1224, %v1270
        %v1272 = vpop.f32.mrf.mxu0
        %v1273 = vpop.f32.mrf.mxu0
        %v1274 = vpop.f32.mrf.mxu0
        %1275 = vdwg.mxu0
        %v1276 = vlaneseq
        %v1277 = vshrl.u32 %v1276, 7
        %v1278 = vsub.s32 1, %v1277
        %v1279 = vrot.slane %v895, %v1278
        %v1280 = vadd.f32 %v1271, %v1279
        %v1281 = vadd.f32 %v880, %v1280
        %v1282 = vsel %vm316, %v1281, 0.0
        %1283 = vadd.xlane.f32.xlu0 %v1282
        %v1284 = vpop.xlane.xlu0 %1283
        %v1285 = vmul.f32 %v1284, %v698
        %v1286 = vsub.f32 %v1281, %v1285
        %v1287 = vmul.f32 %v1286, %v1286
        %v1288 = vsel %vm316, %v1287, 0.0
        %1289 = vadd.xlane.f32.xlu0 %v1288
        %v1290 = vpop.xlane.xlu0 %1289
        %v1291 = vmul.f32 %v1290, %v698
        %v1292 = vadd.f32 %v1291, 1e-12
        %v1293 = vrsqrt.pop %v1292
        %v1294 = vmul.f32 %v1286, %v1293
        %v1295 = vlaneseq
        %v1296 = vshrl.u32 %v1295, 7
        %v1297 = vsub.s32 2, %v1296
        %v1298 = vrot.slane %v895, %v1297
        %v1299 = vmul.f32 %v1294, %v1298
        %v1300 = vlaneseq
        %v1301 = vshrl.u32 %v1300, 7
        %v1302 = vsub.s32 3, %v1301
        %v1303 = vrot.slane %v895, %v1302
        %v1304 = vadd.f32 %v1299, %v1303
        %v1305 = vpack.c.bf16 %v1304, %v1304
        %v1306 = vlaneseq
        %v1307 = vshrl.u32 %v1306, 7
        %v1308 = vsub.s32 4, %v1307
        %v1309 = vrot.slane %v895, %v1308
        %v1314 = vunpack.c.l.b16 %v883
        %v1315 = vunpack.c.l.b16 %v885
        %v1316 = vunpack.c.l.b16 %v887
        %v1317 = vunpack.c.l.b16 %v889
        %v1318 = vpack.c.b16 %v1315, %v1314
        %v1319 = vpack.c.b16 %v1317, %v1316
        %v1323 = vsel %vm316, %v1305, 0
        %1325 = vmatprep.subr.bf16.mxu0 0
        %1326 = vmatpush1.bf16.msra.mxu0 0
        %1327 = vmatprep.subr.bf16.mxu0 0
        %1328 = vmatpush1.bf16.msra.mxu0 0
        %1329 = vmatprep.subr.bf16.mxu0 0
        %1330 = vmatpush1.bf16.msra.mxu0 0
        %1331 = vmatprep.subr.bf16.mxu0 0
        %1332 = vmatpush1.bf16.msra.mxu0 0
        %1333 = vmatprep.subr.bf16.mxu0 0
        %1334 = vmatpush1.bf16.msra.mxu0 0
        %1335 = vmatprep.subr.bf16.mxu0 0
        %1336 = vmatpush1.bf16.msra.mxu0 0
        %1337 = vmatprep.subr.bf16.mxu0 0
        %1338 = vmatpush1.bf16.msra.mxu0 %v1319
        %1339 = vmatprep.subr.bf16.mxu0 0
        %1340 = vmatpush1.bf16.msra.mxu0 %v1318
        %1341 = vmatprep.subr.bf16.mxu0 0
        %1342 = vmatpush2.bf16.msra.mxu0 0
        %1343 = vmatprep.subr.bf16.mxu0 0
        %1344 = vmatpush2.bf16.msra.mxu0 0
        %1345 = vmatprep.subr.bf16.mxu0 0
        %1346 = vmatpush2.bf16.msra.mxu0 0
        %1347 = vmatprep.subr.bf16.mxu0 0
        %1348 = vmatpush2.bf16.msra.mxu0 0
        %1349 = vmatprep.subr.bf16.mxu0 0
        %1350 = vmatpush2.bf16.msra.mxu0 0
        %1351 = vmatprep.subr.bf16.mxu0 0
        %1352 = vmatpush2.bf16.msra.mxu0 0
        %1353 = vmatprep.subr.bf16.mxu0 0
        %1354 = vmatpush2.bf16.msra.mxu0 0
        %1355 = vmatprep.subr.bf16.mxu0 0
        %1356 = vmatpush2.bf16.msra.mxu0 0
        %1357 = vmatprep.mubr.bf16.mxu0 0
        %1358 = vmatmul.mubr.bf16.gmra.mxu0 %v1323
        %v1359 = vpop.f32.mrf.mxu0
        %v1360 = vadd.f32 %v1309, %v1359
        %v1361 = vpop.f32.mrf.mxu0
        %v1362 = vpop.f32.mrf.mxu0
        %v1363 = vpop.f32.mrf.mxu0
        %1364 = vdwg.mxu0
        %v1365 = vmul.f32 %v1360, %v1360
        %v1366 = vmul.f32 %v1360, %v1365
        %v1367 = vmul.f32 %v1366, 0.044715
        %v1368 = vadd.f32 %v1360, %v1367
        %v1369 = vmul.f32 %v1368, 0.7978846
        %v1370 = vtanh.pop %v1369
        %v1371 = vadd.f32 %v1370, 1.0
        %v1372 = vmul.f32 %v1371, 0.5
        %v1373 = vmul.f32 %v1360, %v1372
        %v1374 = vpack.c.bf16 %v1373, %v1373
        %v1375 = vlaneseq
        %v1376 = vshrl.u32 %v1375, 7
        %v1377 = vsub.s32 5, %v1376
        %v1378 = vrot.slane %v895, %v1377
        %v1383 = vunpack.c.h.b16 %v883
        %v1384 = vunpack.c.h.b16 %v885
        %v1385 = vunpack.c.h.b16 %v887
        %v1386 = vunpack.c.h.b16 %v889
        %v1387 = vunpack.c.h.b16 %v890
        %v1388 = vunpack.c.h.b16 %v891
        %v1389 = vunpack.c.h.b16 %v892
        %v1390 = vunpack.c.h.b16 %v893
        %v1391 = vpack.c.b16 %v1384, %v1383
        %v1392 = vpack.c.b16 %v1386, %v1385
        %v1393 = vpack.c.b16 %v1388, %v1387
        %v1394 = vpack.c.b16 %v1390, %v1389
        %v1400 = vsel %vm813, %v1374, 0
        %1402 = vmatprep.subr.bf16.mxu0 0
        %1403 = vmatpush1.bf16.msra.mxu0 0
        %1404 = vmatprep.subr.bf16.mxu0 0
        %1405 = vmatpush1.bf16.msra.mxu0 0
        %1406 = vmatprep.subr.bf16.mxu0 0
        %1407 = vmatpush1.bf16.msra.mxu0 0
        %1408 = vmatprep.subr.bf16.mxu0 0
        %1409 = vmatpush1.bf16.msra.mxu0 0
        %1410 = vmatprep.subr.bf16.mxu0 0
        %1411 = vmatpush1.bf16.msra.mxu0 %v1394
        %1412 = vmatprep.subr.bf16.mxu0 0
        %1413 = vmatpush1.bf16.msra.mxu0 %v1393
        %1414 = vmatprep.subr.bf16.mxu0 0
        %1415 = vmatpush1.bf16.msra.mxu0 %v1392
        %1416 = vmatprep.subr.bf16.mxu0 0
        %1417 = vmatpush1.bf16.msra.mxu0 %v1391
        %1418 = vmatprep.subr.bf16.mxu0 0
        %1419 = vmatpush2.bf16.msra.mxu0 0
        %1420 = vmatprep.subr.bf16.mxu0 0
        %1421 = vmatpush2.bf16.msra.mxu0 0
        %1422 = vmatprep.subr.bf16.mxu0 0
        %1423 = vmatpush2.bf16.msra.mxu0 0
        %1424 = vmatprep.subr.bf16.mxu0 0
        %1425 = vmatpush2.bf16.msra.mxu0 0
        %1426 = vmatprep.subr.bf16.mxu0 0
        %1427 = vmatpush2.bf16.msra.mxu0 0
        %1428 = vmatprep.subr.bf16.mxu0 0
        %1429 = vmatpush2.bf16.msra.mxu0 0
        %1430 = vmatprep.subr.bf16.mxu0 0
        %1431 = vmatpush2.bf16.msra.mxu0 0
        %1432 = vmatprep.subr.bf16.mxu0 0
        %1433 = vmatpush2.bf16.msra.mxu0 0
        %1434 = vmatprep.mubr.bf16.mxu0 0
        %1435 = vmatmul.mubr.bf16.gmra.mxu0 %v1400
        %v1436 = vpop.f32.mrf.mxu0
        %v1437 = vadd.f32 %v1378, %v1436
        %v1438 = vpop.f32.mrf.mxu0
        %v1439 = vpop.f32.mrf.mxu0
        %v1440 = vpop.f32.mrf.mxu0
        %1441 = vdwg.mxu0
        %v1442 = vadd.f32 %v1304, %v1437
        %v1443 = vsel %vm316, %v1442, 0.0
        %1444 = vadd.xlane.f32.xlu0 %v1443
        %v1445 = vpop.xlane.xlu0 %1444
        %v1446 = vmul.f32 %v1445, %v698
        %v1447 = vsub.f32 %v1442, %v1446
        %v1448 = vmul.f32 %v1447, %v1447
        %v1449 = vsel %vm316, %v1448, 0.0
        %1450 = vadd.xlane.f32.xlu0 %v1449
        %v1451 = vpop.xlane.xlu0 %1450
        %v1452 = vmul.f32 %v1451, %v698
        %v1453 = vadd.f32 %v1452, 1e-12
        %v1454 = vrsqrt.pop %v1453
        %v1455 = vmul.f32 %v1447, %v1454
        %v1456 = vlaneseq
        %v1457 = vshrl.u32 %v1456, 7
        %v1458 = vsub.s32 6, %v1457
        %v1459 = vrot.slane %v895, %v1458
        %v1460 = vmul.f32 %v1455, %v1459
        %v1461 = vlaneseq
        %v1462 = vshrl.u32 %v1461, 7
        %v1463 = vsub.s32 7, %v1462
        %v1464 = vrot.slane %v895, %v1463
        %v1465 = vadd.f32 %v1460, %v1464
        %1467 = vset.pattern.permute.xlu0 0
        %1468 = vperm.xlu0 %1467, %v283
        %v1469 = vpop.permute.xlu0 %1468
        %v1471 = vmul.f32 %v1465, %v1469
        %v1472 = vsel %vm316, %v1471, 0.0
        %v1473 = vrot.slane %v1472, 4
        %v1474 = vadd.f32 %v1472, %v1473
        %v1475 = vrot.slane %v1474, 2
        %v1476 = vadd.f32 %v1474, %v1475
        %v1477 = vrot.slane %v1476, 1
        %v1478 = vadd.f32 %v1476, %v1477
        %vm1479 = vcmask 7168
        %v1480 = vsel %vm1479, %v283, 0.0
        %v1481 = vrot.slane %v1480, 4
        %v1482 = vadd.f32 %v1480, %v1481
        %v1483 = vrot.slane %v1482, 2
        %v1484 = vadd.f32 %v1482, %v1483
        %v1485 = vrot.slane %v1484, 1
        %v1486 = vadd.f32 %v1484, %v1485
        %v1487 = vmax.f32 %v1486, 1.0
        %1489 = vset.pattern.permute.xlu0 0
        %1490 = vperm.xlu0 %1489, %v1487
        %v1491 = vpop.permute.xlu0 %1490
        %v1493 = vrcp.pop %v1491
        %v1494 = vmul.f32 %v1478, %v1493
        %vm1495 = vcmask 253952
        %1496 = vst.msk [vmem:[%s268] sm:$0x1] %vm1495, %v1494
        %s1497 = sand.u32 %s149, 1
        %s1498 = scalar_lea.sflag [#allocation4], %s1497
        %s1499 = sand.u32 %s149, 1
        %s1500 = scalar_lea.vmem [#allocation7], %s1499
        // Predicated region
        $region49: #{tpu_custom_call.1} parent=39 // pred_check
          %p1501 = pneg %p159
        $region50: #{tpu_custom_call.1} parent=39 // pred_check_branch
          %1503 = sbr.rel (%p1501) target = $region52
        $region51: #{tpu_custom_call.1} parent=39 // pred_region
          %s1505 = ssub.s32 16, 16
          %1506 = vsyncadd %s1498, %s1505
          %s1507 = smul.addr %s21, 16
          %s1508 = scalar_lea.hbm %s5, %s1507
          %s1510 = sshll.u32 %s1500, 4
          %s1511 = int_to_ptr.vmem [resolvable:$true] %s1510
          %1513 = dma.vmem_to_hbm [thread:$0]  %s1511, 16, %s1508, %s1498
        $region52: #{tpu_custom_call.1} parent=39 // pred_fallthru
          _
      $region40: #{tpu_custom_call.1} parent=5 // pred_fallthru
        _
      %p1514 = scmp.le.s32.totalorder 2, %s16
      // Predicated region
      $region53: #{tpu_custom_call.1} parent=5 // pred_check
        %p1515 = pneg %p1514
      $region54: #{tpu_custom_call.1} parent=5 // pred_check_branch
        %1517 = sbr.rel (%p1515) target = $region56
      $region55: #{tpu_custom_call.1} parent=5 // pred_region
        %s1518 = ssub.s32 %s16, 2
        // Predicated region
        $region57: #{tpu_custom_call.1} parent=55 // pred_check
          %p1519 = pneg %p165
        $region58: #{tpu_custom_call.1} parent=55 // pred_check_branch
          %1521 = sbr.rel (%p1519) target = $region60
        $region59: #{tpu_custom_call.1} parent=55 // pred_region
          %s1522 = sand.u32 %s150, 1
          %s1523 = scalar_lea.sflag [#allocation4], %s1522
          %s1524 = sand.u32 %s150, 1
          %s1525 = scalar_lea.vmem [#allocation7], %s1524
          %1526 = dma.done %s1523, 16
        $region60: #{tpu_custom_call.1} parent=55 // pred_fallthru
          _
      $region56: #{tpu_custom_call.1} parent=5 // pred_fallthru
        _
    $region6: #{tpu_custom_call.1} parent=1 // loop_footer
      %s20 = sadd.s32 1, %s16
    $region7: #{tpu_custom_call.1} parent=1 // loop_footer_branch
      %15 = sbr.rel target = $region3
    $region8: #{tpu_custom_call.1} parent=1 // loop_exit
      _
    %1527 = vsyncpa [#allocation3], 1
    %s1528 = scalar_lea.sflag [#allocation3], 1
    %1529 = vsyncpa %s1528, 1
    %1530 = vsyncpa [#allocation6], 1
    %1531 = vsyncpa [#allocation4], 1
    %s1532 = scalar_lea.sflag [#allocation4], 1
    %1533 = vsyncpa %s1532, 1

</llo_original>
